<compile_context>
chip_gen: v6e
topology: v6e:2x2x1
jax: 0.10.0
libtpu: 0.0.40
codegen_flags: <defaults>
</compile_context>

<pallas_src>
import functools
import math

import jax
import jax.numpy as jnp
import numpy as np
from jax import lax
from jax.experimental import pallas as pl
from jax.experimental.pallas import tpu as pltpu

# ------------- config (mirrors TextConfigs at small, consistent sizes) -------
BATCH = 2
SEQ = 16                         # <= maxSeqLength = 32
EMBED = 32                       # textEmbeddingChannels
INTER = 4 * EMBED                # intermediateEmbedding = 128
HEADS = 4                        # numHeads
HEAD_DIM = EMBED // HEADS        # 8
NUM_LAYERS = 6                   # numLayers (fused into one pallas_call)
EPS = 1e-5                       # rmsNormEps
ROPE_BASE = 10000.0              # RotaryEmbed hard-codes base = 10000


# ------------------------------ in-kernel helpers ----------------------------
def _rms_norm(v, w):
    # torch.nn.RMSNorm: x * rsqrt(mean(x^2, -1) + eps) * weight
    ms = jnp.mean(v * v, axis=-1, keepdims=True)
    return v * lax.rsqrt(ms + EPS) * w


def _gelu_tanh(v):
    c = math.sqrt(2.0 / math.pi)
    return 0.5 * v * (1.0 + jnp.tanh(c * (v + 0.044715 * v * v * v)))


# ---------------------------------- kernel -----------------------------------
def text_decoder_kernel(x_ref, cos_ref, sin_ref, hmask_ref, bias_ref,
                        wqkv_ref, bqkv_ref, wo_ref, bo_ref, normw_ref,
                        wgu_ref, wdown_ref, out_ref, act_ref,
                        *, tokens, heads, head_dim, inter):
    embed = heads * head_dim
    layer = pl.program_id(0)

    @pl.when(layer == 0)
    def _():
        act_ref[...] = x_ref[...]

    x = act_ref[...]                                   # (tokens, C) f32
    normw = normw_ref[0]                               # (2, C) f32

    # ---- RMSNorm(x) with the norm1 weight (added to the attention output) ----
    n1 = _rms_norm(x, normw[0:1, :])

    # ---- fused q|k|v|rot_half(q)|rot_half(k) projection: one MXU pass ----
    qkv = jnp.dot(x.astype(jnp.bfloat16), wqkv_ref[0],
                  preferred_element_type=jnp.float32) + bqkv_ref[0]
    q = qkv[:, 0 * embed:1 * embed]
    k = qkv[:, 1 * embed:2 * embed]
    v = qkv[:, 2 * embed:3 * embed]
    qr = qkv[:, 3 * embed:4 * embed]                   # rotate_half(q)
    kr = qkv[:, 4 * embed:5 * embed]                   # rotate_half(k)

    # ---- rotary embedding: tables precomputed in the wrapper ----
    cos = cos_ref[...]
    sin = sin_ref[...]
    q = q * cos + qr * sin
    k = k * cos + kr * sin

    # ---- multi-head attention: all heads batched into ONE matmul + softmax ---
    hmask = hmask_ref[...]                             # (H*tokens, C) 0/1 f32
    q_stack = jnp.concatenate([q] * heads, axis=0) * hmask
    scores = lax.dot_general(q_stack.astype(jnp.bfloat16), k.astype(jnp.bfloat16),
                             (((1,), (1,)), ((), ())),
                             preferred_element_type=jnp.float32)
    # cross-batch keys get -1e30; reference has no 1/sqrt(hd) scale, no causal mask
    scores = scores + bias_ref[...]

    m = jnp.max(scores, axis=-1, keepdims=True)
    e = jnp.exp(scores - m)
    p = e * pl.reciprocal(jnp.sum(e, axis=-1, keepdims=True), approx=True)
    # NOTE: F.dropout(attMatrix) in the reference is computed but its result is
    # never used (out = softmax(scores) @ v), so it is omitted here.

    ctx = jnp.dot(p.astype(jnp.bfloat16), v.astype(jnp.bfloat16),
                  preferred_element_type=jnp.float32) * hmask
    attn = ctx[0 * tokens:1 * tokens, :]
    for h in range(1, heads):                          # static; heads = 4
        attn = attn + ctx[h * tokens:(h + 1) * tokens, :]

    attn = jnp.dot(attn.astype(jnp.bfloat16), wo_ref[0],
                   preferred_element_type=jnp.float32) + bo_ref[0]

    # ---- x = att(x) + norm1(x) ----
    x = attn + n1

    # ---- x = FF(x) + norm2(x): Gemma gated FF, gelu-tanh, no biases ----
    n2 = _rms_norm(x, normw[1:2, :])
    gu = jnp.dot(x.astype(jnp.bfloat16), wgu_ref[0],
                 preferred_element_type=jnp.float32)   # (tokens, 2*inter)
    h_ff = _gelu_tanh(gu[:, :inter]) * gu[:, inter:]
    ff = jnp.dot(h_ff.astype(jnp.bfloat16), wdown_ref[0],
                 preferred_element_type=jnp.float32)
    x = ff + n2

    act_ref[...] = x                                   # carried to next layer

    @pl.when(layer == pl.num_programs(0) - 1)
    def _():
        out_ref[...] = x.astype(out_ref.dtype)


# ------------------------------ wrapper / glue -------------------------------
def _res_spec(shape):
    # resident block: same block index for every layer iteration
    n = len(shape)
    return pl.BlockSpec(shape, lambda l, _n=n: (0,) * _n)


def _layer_spec(shape):
    # per-layer weight block: leading dim indexed by the layer grid axis
    n = len(shape) - 1
    return pl.BlockSpec((1,) + tuple(shape[1:]), lambda l, _n=n: (l,) + (0,) * _n)


def text_decoder_stack(x, curr_pos, kparams):
    """x: (B, S, C); curr_pos: (B, S) int position ids; kparams stacked over L."""
    wqkv, bqkv, wo, bo, normw, wgu, wdown = kparams
    B, S, C = x.shape
    L = wqkv.shape[0]
    H = HEADS
    hd = C // H
    hh = hd // 2
    I = wdown.shape[1]
    tokens = B * S

    x2 = x.reshape(tokens, C).astype(jnp.float32)
    pos = curr_pos.reshape(tokens).astype(jnp.float32)

    # RoPE tables (plain XLA, hoisted out of the kernel).
    chan = jnp.arange(C)
    inv_freq = ROPE_BASE ** (-((chan % hd) % hh).astype(jnp.float32))
    angle = pos[:, None] * inv_freq[None, :]                       # (tokens, C)
    cos = jnp.cos(angle)
    sin = jnp.sin(angle)

    # Precomputed head mask (channels of each replicated head block) and the
    # additive bias masking cross-batch keys in the fused softmax.
    row = jnp.arange(H * tokens)
    hmask = ((row[:, None] // tokens) == (chan[None, :] // hd)).astype(jnp.float32)
    qb = (row % tokens) // S
    kb = jnp.arange(tokens) // S
    bias = jnp.where(qb[:, None] == kb[None, :], 0.0, -1e30).astype(jnp.float32)

    kernel = functools.partial(text_decoder_kernel, tokens=tokens, heads=H,
                               head_dim=hd, inter=I)

    out = pl.pallas_call(
        kernel,
        out_shape=jax.ShapeDtypeStruct((tokens, C), jnp.float32),
        grid=(L,),
        in_specs=[
            _res_spec((tokens, C)),           # x
            _res_spec((tokens, C)),           # cos
            _res_spec((tokens, C)),           # sin
            _res_spec((H * tokens, C)),       # head mask
            _res_spec((H * tokens, tokens)),  # batch softmax bias
            _layer_spec(wqkv.shape),
            _layer_spec(bqkv.shape),
            _layer_spec(wo.shape),
            _layer_spec(bo.shape),
            _layer_spec(normw.shape),
            _layer_spec(wgu.shape),
            _layer_spec(wdown.shape),
        ],
        out_specs=_res_spec((tokens, C)),
        scratch_shapes=[pltpu.VMEM((tokens, C), jnp.float32)],
        compiler_params=pltpu.CompilerParams(
            dimension_semantics=("arbitrary",)),   # layer axis is sequential
    )(x2, cos, sin, hmask, bias, wqkv, bqkv, wo, bo, normw, wgu, wdown)

    return out.reshape(B, S, C)


# --------------------------- parameters & reference --------------------------
def init_params(key, num_layers):
    """Raw torch-layout weights per layer + fused / stacked kernel tensors."""
    C, I = EMBED, INTER
    hd, hh = HEAD_DIM, HEAD_DIM // 2

    # signed permutation matrix R with (q @ R) == rotate_half(q) on the flat,
    # head-major channel layout (per-head: first half -> -second, second -> first)
    R_np = np.zeros((C, C), np.float32)
    for c in range(C):
        d = c % hd
        if d < hh:
            R_np[c + hh, c] = -1.0
        else:
            R_np[c - hh, c] = 1.0
    R = jnp.asarray(R_np)

    raw = []
    for lk in jax.random.split(key, num_layers):
        ks = jax.random.split(lk, 11)
        rnd = lambda k, shape, s=0.05: jax.random.normal(k, shape, jnp.float32) * s
        raw.append(dict(
            wq=rnd(ks[0], (C, C)), wk=rnd(ks[1], (C, C)), wv=rnd(ks[2], (C, C)),
            wo=rnd(ks[3], (C, C)),
            bq=rnd(ks[4], (C,), 0.02), bk=rnd(ks[5], (C,), 0.02),
            bv=rnd(ks[6], (C,), 0.02), bo=rnd(ks[7], (C,), 0.02),
            wg=rnd(ks[8], (I, C)), wu=rnd(ks[9], (I, C)), wd=rnd(ks[10], (C, I)),
        ))

    def fuse(p):
        wq_t, wk_t, wv_t = p['wq'].T, p['wk'].T, p['wv'].T
        wqkv = jnp.concatenate([wq_t, wk_t, wv_t, wq_t @ R, wk_t @ R], axis=1)
        bqkv = jnp.concatenate([p['bq'], p['bk'], p['bv'],
                                p['bq'] @ R, p['bk'] @ R]).reshape(1, 5 * C)
        return (wqkv.astype(jnp.bfloat16),                    # (C, 5C)
                bqkv,                                         # (1, 5C) f32
                p['wo'].T.astype(jnp.bfloat16),               # (C, C)
                p['bo'].reshape(1, C),                        # (1, C) f32
                jnp.ones((2, C), jnp.float32),                # norm1/norm2 weights
                jnp.concatenate([p['wg'].T, p['wu'].T], 1).astype(jnp.bfloat16),
                p['wd'].T.astype(jnp.bfloat16))               # (I, C)

    fused = [fuse(p) for p in raw]
    kparams = tuple(jnp.stack([f[i] for f in fused], axis=0) for i in range(7))
    return raw, kparams


def _lin(t, w, b=None):
    y = jnp.dot(t.astype(jnp.bfloat16), w.T.astype(jnp.bfloat16),
                preferred_element_type=jnp.float32)
    return y + b if b is not None else y


def ref_text_decoder(x, pos_ids, p):
    """Pure-JAX transcription of the PyTorch TextDecoder.forward (one layer)."""
    B, S, C = x.shape
    H, hd = HEADS, C // HEADS
    hh = hd // 2

    q = _lin(x, p['wq'], p['bq']).reshape(B, S, H, hd).transpose(0, 2, 1, 3)
    k = _lin(x, p['wk'], p['bk']).reshape(B, S, H, hd).transpose(0, 2, 1, 3)
    v = _lin(x, p['wv'], p['bv']).reshape(B, S, H, hd).transpose(0, 2, 1, 3)

    freqs = 1.0 / (ROPE_BASE ** jnp.arange(hh, dtype=jnp.float32))
    emb = pos_ids.astype(jnp.float32)[:, :, None] * freqs[None, None, :]
    emb = jnp.concatenate([emb, emb], axis=-1)                 # (B, S, hd)
    cos = jnp.cos(emb)[:, None]
    sin = jnp.sin(emb)[:, None]
    rot = lambda t: jnp.concatenate([-t[..., hh:], t[..., :hh]], axis=-1)
    q = q * cos + rot(q) * sin
    k = k * cos + rot(k) * sin

    att = jnp.einsum('bhqd,bhkd->bhqk', q.astype(jnp.bfloat16),
                     k.astype(jnp.bfloat16), preferred_element_type=jnp.float32)
    att = jax.nn.softmax(att, axis=-1)        # dropout result is discarded
    out = jnp.einsum('bhqk,bhkd->bhqd', att.astype(jnp.bfloat16),
                     v.astype(jnp.bfloat16), preferred_element_type=jnp.float32)
    out = out.transpose(0, 2, 1, 3).reshape(B, S, C)
    out = _lin(out, p['wo'], p['bo'])

    rms = lambda t: t * lax.rsqrt(jnp.mean(t * t, -1, keepdims=True) + EPS)
    x = out + rms(x)                          # RMSNorm weights are ones (init)
    gate = _lin(x, p['wg'])
    up = _lin(x, p['wu'])
    x = _lin(_gelu_tanh(gate) * up, p['wd']) + rms(x)
    return x


# ----------------------------------- main ------------------------------------
if __name__ == "__main__":
    key = jax.random.PRNGKey(0)
    kx, kp = jax.random.split(key)

    x = jax.random.normal(kx, (BATCH, SEQ, EMBED), jnp.float32)
    curr_pos = jnp.tile(jnp.arange(SEQ, dtype=jnp.int32)[None, :], (BATCH, 1))

    raw, kparams = init_params(kp, NUM_LAYERS)

    # 1) single layer == exactly the reference TextDecoder.forward
    kparams1 = tuple(p[:1] for p in kparams)
    out1 = jax.block_until_ready(text_decoder_stack(x, curr_pos, kparams1))
    ref1 = ref_text_decoder(x, curr_pos, raw[0])
    np.testing.assert_allclose(np.asarray(out1), np.asarray(ref1), rtol=0, atol=1e-2)

    # 2) NUM_LAYERS stacked decoder blocks fused into ONE pallas_call
    #    (amortizes launch + weight-DMA overhead; each grid step is one layer).
    outL = jax.block_until_ready(text_decoder_stack(x, curr_pos, kparams))
    refL = x
    for p in raw:
        refL = ref_text_decoder(refL, curr_pos, p)
    np.testing.assert_allclose(np.asarray(outL), np.asarray(refL), rtol=0, atol=1e-2)

    assert out1.shape == (BATCH, SEQ, EMBED)
    assert bool(jnp.all(jnp.isfinite(outL)))
    print("KERNEL_OK")
</pallas_src>

<mosaic_0001>
module attributes {stable_mosaic.version = 11 : i64} {
  func.func @text_decoder_kernel(%arg0: i32, %arg1: memref<32x32xf32, #tpu.memory_space<vmem>>, %arg2: memref<32x32xf32, #tpu.memory_space<vmem>>, %arg3: memref<32x32xf32, #tpu.memory_space<vmem>>, %arg4: memref<128x32xf32, #tpu.memory_space<vmem>>, %arg5: memref<128x32xf32, #tpu.memory_space<vmem>>, %arg6: memref<1x32x160xbf16, #tpu.memory_space<vmem>>, %arg7: memref<1x1x160xf32, #tpu.memory_space<vmem>>, %arg8: memref<1x32x32xbf16, #tpu.memory_space<vmem>>, %arg9: memref<1x1x32xf32, #tpu.memory_space<vmem>>, %arg10: memref<1x2x32xf32, #tpu.memory_space<vmem>>, %arg11: memref<1x32x256xbf16, #tpu.memory_space<vmem>>, %arg12: memref<1x128x32xbf16, #tpu.memory_space<vmem>>, %arg13: memref<32x32xf32, #tpu.memory_space<vmem>>, %arg14: memref<32x32xf32, #tpu.memory_space<vmem>>) attributes {dimension_semantics = [#tpu.dimension_semantics<arbitrary>], iteration_bounds = array<i64: 1>, scalar_prefetch = 0 : i64, scratch_operands = 1 : i64, tpu.core_type = #tpu.core_type<tc>, window_params = [{pipeline_mode = #tpu.pipeline_mode<synchronous>, transform_indices = @transform_0, window_bounds = array<i64: 32, 32>}, {pipeline_mode = #tpu.pipeline_mode<synchronous>, transform_indices = @transform_1, window_bounds = array<i64: 32, 32>}, {pipeline_mode = #tpu.pipeline_mode<synchronous>, transform_indices = @transform_2, window_bounds = array<i64: 32, 32>}, {pipeline_mode = #tpu.pipeline_mode<synchronous>, transform_indices = @transform_3, window_bounds = array<i64: 128, 32>}, {pipeline_mode = #tpu.pipeline_mode<synchronous>, transform_indices = @transform_4, window_bounds = array<i64: 128, 32>}, {transform_indices = @transform_5, window_bounds = array<i64: 1, 32, 160>}, {transform_indices = @transform_6, window_bounds = array<i64: 1, 1, 160>}, {transform_indices = @transform_7, window_bounds = array<i64: 1, 32, 32>}, {transform_indices = @transform_8, window_bounds = array<i64: 1, 1, 32>}, {transform_indices = @transform_9, window_bounds = array<i64: 1, 2, 32>}, {transform_indices = @transform_10, window_bounds = array<i64: 1, 32, 256>}, {transform_indices = @transform_11, window_bounds = array<i64: 1, 128, 32>}, {pipeline_mode = #tpu.pipeline_mode<synchronous>, transform_indices = @transform_12, window_bounds = array<i64: 32, 32>}]} {
    %c0_i32 = arith.constant 0 : i32
    %0 = arith.cmpi eq, %arg0, %c0_i32 : i32
    %1 = arith.extui %0 : i1 to i32
    %c0_i32_0 = arith.constant 0 : i32
    %2 = arith.cmpi ne, %1, %c0_i32_0 : i32
    scf.if %2 {
      %c0_52 = arith.constant 0 : index
      %c0_53 = arith.constant 0 : index
      %120 = vector.load %arg1[%c0_52, %c0_53] : memref<32x32xf32, #tpu.memory_space<vmem>>, vector<32x32xf32>
      %c0_54 = arith.constant 0 : index
      %c0_55 = arith.constant 0 : index
      %121 = vector.load %arg14[%c0_54, %c0_55] : memref<32x32xf32, #tpu.memory_space<vmem>>, vector<32x32xf32>
      tpu.vector_store %arg14[%c0_54, %c0_55], %120 {strides = array<i32>} : memref<32x32xf32, #tpu.memory_space<vmem>>, vector<32x32xf32>,
    } else {
    }
    %c0 = arith.constant 0 : index
    %c0_1 = arith.constant 0 : index
    %3 = vector.load %arg14[%c0, %c0_1] : memref<32x32xf32, #tpu.memory_space<vmem>>, vector<32x32xf32>
    %c0_2 = arith.constant 0 : index
    %c0_3 = arith.constant 0 : index
    %c0_4 = arith.constant 0 : index
    %4 = vector.load %arg10[%c0_2, %c0_3, %c0_4] : memref<1x2x32xf32, #tpu.memory_space<vmem>>, vector<1x2x32xf32>
    %5 = vector.shape_cast %4 : vector<1x2x32xf32> to vector<2x32xf32>
    %6 = vector.extract_strided_slice %5 {offsets = [0, 0], sizes = [1, 32], strides = [1, 1]} : vector<2x32xf32> to vector<1x32xf32>
    %7 = arith.mulf %3, %3 : vector<32x32xf32>
    %cst = arith.constant dense<0.000000e+00> : vector<32xf32>
    %8 = vector.multi_reduction <add>, %7, %cst [1] : vector<32x32xf32> to vector<32xf32>
    %9 = vector.shape_cast %8 : vector<32xf32> to vector<32x1xf32>
    %cst_5 = arith.constant 3.200000e+01 : f32
    %10 = vector.broadcast %cst_5 : f32 to vector<32x1xf32>
    %11 = arith.divf %9, %10 : vector<32x1xf32>
    %cst_6 = arith.constant 9.99999974E-6 : f32
    %12 = vector.broadcast %cst_6 : f32 to vector<32x1xf32>
    %13 = arith.addf %11, %12 : vector<32x1xf32>
    %14 = math.rsqrt %13 : vector<32x1xf32>
    %15 = vector.broadcast %14 : vector<32x1xf32> to vector<32x32xf32>
    %16 = arith.mulf %3, %15 : vector<32x32xf32>
    %17 = vector.broadcast %6 : vector<1x32xf32> to vector<32x32xf32>
    %18 = arith.mulf %16, %17 : vector<32x32xf32>
    %19 = arith.truncf %3 : vector<32x32xf32> to vector<32x32xbf16>
    %c0_7 = arith.constant 0 : index
    %c0_8 = arith.constant 0 : index
    %c0_9 = arith.constant 0 : index
    %20 = vector.load %arg6[%c0_7, %c0_8, %c0_9] : memref<1x32x160xbf16, #tpu.memory_space<vmem>>, vector<1x32x160xbf16>
    %21 = vector.shape_cast %20 : vector<1x32x160xbf16> to vector<32x160xbf16>
    %cst_10 = arith.constant dense<0.000000e+00> : vector<32x160xf32>
    %22 = tpu.matmul %19, %21, %cst_10 {dimension_numbers = #tpu.dot_dimension_numbers<[1], [0], [0], [1], [0, 0, 1, 1], [], []>} : vector<32x32xbf16>, vector<32x160xbf16>, vector<32x160xf32> -> vector<32x160xf32>
    %c0_11 = arith.constant 0 : index
    %c0_12 = arith.constant 0 : index
    %c0_13 = arith.constant 0 : index
    %23 = vector.load %arg7[%c0_11, %c0_12, %c0_13] : memref<1x1x160xf32, #tpu.memory_space<vmem>>, vector<1x1x160xf32>
    %24 = vector.shape_cast %23 : vector<1x1x160xf32> to vector<1x160xf32>
    %25 = vector.broadcast %24 : vector<1x160xf32> to vector<32x160xf32>
    %26 = arith.addf %22, %25 : vector<32x160xf32>
    %27 = vector.extract_strided_slice %26 {offsets = [0, 0], sizes = [32, 32], strides = [1, 1]} : vector<32x160xf32> to vector<32x32xf32>
    %28 = vector.extract_strided_slice %26 {offsets = [0, 32], sizes = [32, 32], strides = [1, 1]} : vector<32x160xf32> to vector<32x32xf32>
    %29 = vector.extract_strided_slice %26 {offsets = [0, 64], sizes = [32, 32], strides = [1, 1]} : vector<32x160xf32> to vector<32x32xf32>
    %30 = vector.extract_strided_slice %26 {offsets = [0, 96], sizes = [32, 32], strides = [1, 1]} : vector<32x160xf32> to vector<32x32xf32>
    %31 = vector.extract_strided_slice %26 {offsets = [0, 128], sizes = [32, 32], strides = [1, 1]} : vector<32x160xf32> to vector<32x32xf32>
    %c0_14 = arith.constant 0 : index
    %c0_15 = arith.constant 0 : index
    %32 = vector.load %arg2[%c0_14, %c0_15] : memref<32x32xf32, #tpu.memory_space<vmem>>, vector<32x32xf32>
    %c0_16 = arith.constant 0 : index
    %c0_17 = arith.constant 0 : index
    %33 = vector.load %arg3[%c0_16, %c0_17] : memref<32x32xf32, #tpu.memory_space<vmem>>, vector<32x32xf32>
    %34 = arith.mulf %27, %32 : vector<32x32xf32>
    %35 = arith.mulf %30, %33 : vector<32x32xf32>
    %36 = arith.addf %34, %35 : vector<32x32xf32>
    %37 = arith.mulf %28, %32 : vector<32x32xf32>
    %38 = arith.mulf %31, %33 : vector<32x32xf32>
    %39 = arith.addf %37, %38 : vector<32x32xf32>
    %c0_18 = arith.constant 0 : index
    %c0_19 = arith.constant 0 : index
    %40 = vector.load %arg4[%c0_18, %c0_19] : memref<128x32xf32, #tpu.memory_space<vmem>>, vector<128x32xf32>
    %41 = tpu.concatenate %36, %36, %36, %36 in 0 : vector<32x32xf32>, vector<32x32xf32>, vector<32x32xf32>, vector<32x32xf32> -> vector<128x32xf32>
    %42 = arith.mulf %41, %40 : vector<128x32xf32>
    %43 = arith.truncf %42 : vector<128x32xf32> to vector<128x32xbf16>
    %44 = arith.truncf %39 : vector<32x32xf32> to vector<32x32xbf16>
    %cst_20 = arith.constant dense<0.000000e+00> : vector<128x32xf32>
    %45 = tpu.matmul %43, %44, %cst_20 {dimension_numbers = #tpu.dot_dimension_numbers<[1], [1], [0], [0], [0, 0, 1, 0], [], []>} : vector<128x32xbf16>, vector<32x32xbf16>, vector<128x32xf32> -> vector<128x32xf32>
    %c0_21 = arith.constant 0 : index
    %c0_22 = arith.constant 0 : index
    %46 = vector.load %arg5[%c0_21, %c0_22] : memref<128x32xf32, #tpu.memory_space<vmem>>, vector<128x32xf32>
    %47 = arith.addf %45, %46 : vector<128x32xf32>
    %cst_23 = arith.constant dense<0xFF800000> : vector<128xf32>
    %48 = vector.multi_reduction <maximumf>, %47, %cst_23 [1] : vector<128x32xf32> to vector<128xf32>
    %49 = vector.shape_cast %48 : vector<128xf32> to vector<128x1xf32>
    %50 = vector.broadcast %49 : vector<128x1xf32> to vector<128x32xf32>
    %51 = arith.subf %47, %50 : vector<128x32xf32>
    %52 = math.exp %51 : vector<128x32xf32>
    %cst_24 = arith.constant dense<0.000000e+00> : vector<128xf32>
    %53 = vector.multi_reduction <add>, %52, %cst_24 [1] : vector<128x32xf32> to vector<128xf32>
    %54 = vector.shape_cast %53 : vector<128xf32> to vector<128x1xf32>
    %55 = tpu.reciprocal %54 {approx = true} : vector<128x1xf32> -> vector<128x1xf32>
    %56 = vector.broadcast %55 : vector<128x1xf32> to vector<128x32xf32>
    %57 = arith.mulf %52, %56 : vector<128x32xf32>
    %58 = arith.truncf %57 : vector<128x32xf32> to vector<128x32xbf16>
    %59 = arith.truncf %29 : vector<32x32xf32> to vector<32x32xbf16>
    %cst_25 = arith.constant dense<0.000000e+00> : vector<128x32xf32>
    %60 = tpu.matmul %58, %59, %cst_25 {dimension_numbers = #tpu.dot_dimension_numbers<[1], [0], [0], [1], [0, 0, 1, 1], [], []>} : vector<128x32xbf16>, vector<32x32xbf16>, vector<128x32xf32> -> vector<128x32xf32>
    %61 = arith.mulf %60, %40 : vector<128x32xf32>
    %62 = vector.extract_strided_slice %61 {offsets = [0, 0], sizes = [32, 32], strides = [1, 1]} : vector<128x32xf32> to vector<32x32xf32>
    %63 = vector.extract_strided_slice %61 {offsets = [32, 0], sizes = [32, 32], strides = [1, 1]} : vector<128x32xf32> to vector<32x32xf32>
    %64 = arith.addf %62, %63 : vector<32x32xf32>
    %65 = vector.extract_strided_slice %61 {offsets = [64, 0], sizes = [32, 32], strides = [1, 1]} : vector<128x32xf32> to vector<32x32xf32>
    %66 = arith.addf %64, %65 : vector<32x32xf32>
    %67 = vector.extract_strided_slice %61 {offsets = [96, 0], sizes = [32, 32], strides = [1, 1]} : vector<128x32xf32> to vector<32x32xf32>
    %68 = arith.addf %66, %67 : vector<32x32xf32>
    %69 = arith.truncf %68 : vector<32x32xf32> to vector<32x32xbf16>
    %c0_26 = arith.constant 0 : index
    %c0_27 = arith.constant 0 : index
    %c0_28 = arith.constant 0 : index
    %70 = vector.load %arg8[%c0_26, %c0_27, %c0_28] : memref<1x32x32xbf16, #tpu.memory_space<vmem>>, vector<1x32x32xbf16>
    %71 = vector.shape_cast %70 : vector<1x32x32xbf16> to vector<32x32xbf16>
    %cst_29 = arith.constant dense<0.000000e+00> : vector<32x32xf32>
    %72 = tpu.matmul %69, %71, %cst_29 {dimension_numbers = #tpu.dot_dimension_numbers<[1], [0], [0], [1], [0, 0, 1, 1], [], []>} : vector<32x32xbf16>, vector<32x32xbf16>, vector<32x32xf32> -> vector<32x32xf32>
    %c0_30 = arith.constant 0 : index
    %c0_31 = arith.constant 0 : index
    %c0_32 = arith.constant 0 : index
    %73 = vector.load %arg9[%c0_30, %c0_31, %c0_32] : memref<1x1x32xf32, #tpu.memory_space<vmem>>, vector<1x1x32xf32>
    %74 = vector.shape_cast %73 : vector<1x1x32xf32> to vector<1x32xf32>
    %75 = vector.broadcast %74 : vector<1x32xf32> to vector<32x32xf32>
    %76 = arith.addf %72, %75 : vector<32x32xf32>
    %77 = arith.addf %76, %18 : vector<32x32xf32>
    %78 = vector.extract_strided_slice %5 {offsets = [1, 0], sizes = [1, 32], strides = [1, 1]} : vector<2x32xf32> to vector<1x32xf32>
    %79 = arith.mulf %77, %77 : vector<32x32xf32>
    %cst_33 = arith.constant dense<0.000000e+00> : vector<32xf32>
    %80 = vector.multi_reduction <add>, %79, %cst_33 [1] : vector<32x32xf32> to vector<32xf32>
    %81 = vector.shape_cast %80 : vector<32xf32> to vector<32x1xf32>
    %cst_34 = arith.constant 3.200000e+01 : f32
    %82 = vector.broadcast %cst_34 : f32 to vector<32x1xf32>
    %83 = arith.divf %81, %82 : vector<32x1xf32>
    %cst_35 = arith.constant 9.99999974E-6 : f32
    %84 = vector.broadcast %cst_35 : f32 to vector<32x1xf32>
    %85 = arith.addf %83, %84 : vector<32x1xf32>
    %86 = math.rsqrt %85 : vector<32x1xf32>
    %87 = vector.broadcast %86 : vector<32x1xf32> to vector<32x32xf32>
    %88 = arith.mulf %77, %87 : vector<32x32xf32>
    %89 = vector.broadcast %78 : vector<1x32xf32> to vector<32x32xf32>
    %90 = arith.mulf %88, %89 : vector<32x32xf32>
    %91 = arith.truncf %77 : vector<32x32xf32> to vector<32x32xbf16>
    %c0_36 = arith.constant 0 : index
    %c0_37 = arith.constant 0 : index
    %c0_38 = arith.constant 0 : index
    %92 = vector.load %arg11[%c0_36, %c0_37, %c0_38] : memref<1x32x256xbf16, #tpu.memory_space<vmem>>, vector<1x32x256xbf16>
    %93 = vector.shape_cast %92 : vector<1x32x256xbf16> to vector<32x256xbf16>
    %cst_39 = arith.constant dense<0.000000e+00> : vector<32x256xf32>
    %94 = tpu.matmul %91, %93, %cst_39 {dimension_numbers = #tpu.dot_dimension_numbers<[1], [0], [0], [1], [0, 0, 1, 1], [], []>} : vector<32x32xbf16>, vector<32x256xbf16>, vector<32x256xf32> -> vector<32x256xf32>
    %95 = vector.extract_strided_slice %94 {offsets = [0, 0], sizes = [32, 128], strides = [1, 1]} : vector<32x256xf32> to vector<32x128xf32>
    %cst_40 = arith.constant 5.000000e-01 : f32
    %96 = vector.broadcast %cst_40 : f32 to vector<32x128xf32>
    %97 = arith.mulf %96, %95 : vector<32x128xf32>
    %cst_41 = arith.constant 4.471500e-02 : f32
    %98 = vector.broadcast %cst_41 : f32 to vector<32x128xf32>
    %99 = arith.mulf %98, %95 : vector<32x128xf32>
    %100 = arith.mulf %99, %95 : vector<32x128xf32>
    %101 = arith.mulf %100, %95 : vector<32x128xf32>
    %102 = arith.addf %95, %101 : vector<32x128xf32>
    %cst_42 = arith.constant 0.797884583 : f32
    %103 = vector.broadcast %cst_42 : f32 to vector<32x128xf32>
    %104 = arith.mulf %103, %102 : vector<32x128xf32>
    %105 = math.tanh %104 : vector<32x128xf32>
    %cst_43 = arith.constant 1.000000e+00 : f32
    %106 = vector.broadcast %cst_43 : f32 to vector<32x128xf32>
    %107 = arith.addf %106, %105 : vector<32x128xf32>
    %108 = arith.mulf %97, %107 : vector<32x128xf32>
    %109 = vector.extract_strided_slice %94 {offsets = [0, 128], sizes = [32, 128], strides = [1, 1]} : vector<32x256xf32> to vector<32x128xf32>
    %110 = arith.mulf %108, %109 : vector<32x128xf32>
    %111 = arith.truncf %110 : vector<32x128xf32> to vector<32x128xbf16>
    %c0_44 = arith.constant 0 : index
    %c0_45 = arith.constant 0 : index
    %c0_46 = arith.constant 0 : index
    %112 = vector.load %arg12[%c0_44, %c0_45, %c0_46] : memref<1x128x32xbf16, #tpu.memory_space<vmem>>, vector<1x128x32xbf16>
    %113 = vector.shape_cast %112 : vector<1x128x32xbf16> to vector<128x32xbf16>
    %cst_47 = arith.constant dense<0.000000e+00> : vector<32x32xf32>
    %114 = tpu.matmul %111, %113, %cst_47 {dimension_numbers = #tpu.dot_dimension_numbers<[1], [0], [0], [1], [0, 0, 1, 1], [], []>} : vector<32x128xbf16>, vector<128x32xbf16>, vector<32x32xf32> -> vector<32x32xf32>
    %115 = arith.addf %114, %90 : vector<32x32xf32>
    %c0_48 = arith.constant 0 : index
    %c0_49 = arith.constant 0 : index
    %116 = vector.load %arg14[%c0_48, %c0_49] : memref<32x32xf32, #tpu.memory_space<vmem>>, vector<32x32xf32>
    tpu.vector_store %arg14[%c0_48, %c0_49], %115 {strides = array<i32>} : memref<32x32xf32, #tpu.memory_space<vmem>>, vector<32x32xf32>,
    %c0_i32_50 = arith.constant 0 : i32
    %117 = arith.cmpi eq, %arg0, %c0_i32_50 : i32
    %118 = arith.extui %117 : i1 to i32
    %c0_i32_51 = arith.constant 0 : i32
    %119 = arith.cmpi ne, %118, %c0_i32_51 : i32
    scf.if %119 {
      %c0_52 = arith.constant 0 : index
      %c0_53 = arith.constant 0 : index
      %120 = vector.load %arg13[%c0_52, %c0_53] : memref<32x32xf32, #tpu.memory_space<vmem>>, vector<32x32xf32>
      tpu.vector_store %arg13[%c0_52, %c0_53], %115 {strides = array<i32>} : memref<32x32xf32, #tpu.memory_space<vmem>>, vector<32x32xf32>,
    } else {
    }
    return
  }
  func.func @transform_0(%arg0: i32) -> (i32, i32) {
    %c0_i32 = arith.constant 0 : i32
    %c0_i32_0 = arith.constant 0 : i32
    %c0_i32_1 = arith.constant 0 : i32
    return %c0_i32, %c0_i32_0 : i32, i32
  }
  func.func @transform_1(%arg0: i32) -> (i32, i32) {
    %c0_i32 = arith.constant 0 : i32
    %c0_i32_0 = arith.constant 0 : i32
    %c0_i32_1 = arith.constant 0 : i32
    return %c0_i32, %c0_i32_0 : i32, i32
  }
  func.func @transform_2(%arg0: i32) -> (i32, i32) {
    %c0_i32 = arith.constant 0 : i32
    %c0_i32_0 = arith.constant 0 : i32
    %c0_i32_1 = arith.constant 0 : i32
    return %c0_i32, %c0_i32_0 : i32, i32
  }
  func.func @transform_3(%arg0: i32) -> (i32, i32) {
    %c0_i32 = arith.constant 0 : i32
    %c0_i32_0 = arith.constant 0 : i32
    %c0_i32_1 = arith.constant 0 : i32
    return %c0_i32, %c0_i32_0 : i32, i32
  }
  func.func @transform_4(%arg0: i32) -> (i32, i32) {
    %c0_i32 = arith.constant 0 : i32
    %c0_i32_0 = arith.constant 0 : i32
    %c0_i32_1 = arith.constant 0 : i32
    return %c0_i32, %c0_i32_0 : i32, i32
  }
  func.func @transform_5(%arg0: i32) -> (i32, i32, i32) {
    %c0_i32 = arith.constant 0 : i32
    %c0_i32_0 = arith.constant 0 : i32
    %c0_i32_1 = arith.constant 0 : i32
    return %arg0, %c0_i32, %c0_i32_0 : i32, i32, i32
  }
  func.func @transform_6(%arg0: i32) -> (i32, i32, i32) {
    %c0_i32 = arith.constant 0 : i32
    %c0_i32_0 = arith.constant 0 : i32
    %c0_i32_1 = arith.constant 0 : i32
    return %arg0, %c0_i32, %c0_i32_0 : i32, i32, i32
  }
  func.func @transform_7(%arg0: i32) -> (i32, i32, i32) {
    %c0_i32 = arith.constant 0 : i32
    %c0_i32_0 = arith.constant 0 : i32
    %c0_i32_1 = arith.constant 0 : i32
    return %arg0, %c0_i32, %c0_i32_0 : i32, i32, i32
  }
  func.func @transform_8(%arg0: i32) -> (i32, i32, i32) {
    %c0_i32 = arith.constant 0 : i32
    %c0_i32_0 = arith.constant 0 : i32
    %c0_i32_1 = arith.constant 0 : i32
    return %arg0, %c0_i32, %c0_i32_0 : i32, i32, i32
  }
  func.func @transform_9(%arg0: i32) -> (i32, i32, i32) {
    %c0_i32 = arith.constant 0 : i32
    %c0_i32_0 = arith.constant 0 : i32
    %c0_i32_1 = arith.constant 0 : i32
    return %arg0, %c0_i32, %c0_i32_0 : i32, i32, i32
  }
  func.func @transform_10(%arg0: i32) -> (i32, i32, i32) {
    %c0_i32 = arith.constant 0 : i32
    %c0_i32_0 = arith.constant 0 : i32
    %c0_i32_1 = arith.constant 0 : i32
    return %arg0, %c0_i32, %c0_i32_0 : i32, i32, i32
  }
  func.func @transform_11(%arg0: i32) -> (i32, i32, i32) {
    %c0_i32 = arith.constant 0 : i32
    %c0_i32_0 = arith.constant 0 : i32
    %c0_i32_1 = arith.constant 0 : i32
    return %arg0, %c0_i32, %c0_i32_0 : i32, i32, i32
  }
  func.func @transform_12(%arg0: i32) -> (i32, i32) {
    %c0_i32 = arith.constant 0 : i32
    %c0_i32_0 = arith.constant 0 : i32
    %c0_i32_1 = arith.constant 0 : i32
    return %c0_i32, %c0_i32_0 : i32, i32
  }
}

</mosaic_0001>

<llo_original>
// kernel: tpu_custom_call.1
$region0: #{tpu_custom_call.1}
  #allocation0 [shape = 'u32[]', space=smem, size = 0x4, offset = 0x4, fixed_abs, tag = 'smem constant byte address 0x4 - core index']
  #allocation1 [shape = 'u32[144,128]{1,0:T(1,128)}', space=vmem, size = 0x12000, scoped, tag = 'internal scratch']
  #allocation2 [shape = 'f32[32,32]{1,0:T(8,128)}', space=vmem, size = 0x4000, scoped, tag = 'scratch operand']
  %s0 = inlined_call_operand.vmem [shape: f32[32,32], index: 0, kind: input, shape index: {}]
  %s1 = inlined_call_operand.vmem [shape: f32[32,32], index: 1, kind: input, shape index: {}]
  %s2 = inlined_call_operand.vmem [shape: f32[32,32], index: 2, kind: input, shape index: {}]
  %s3 = inlined_call_operand.vmem [shape: f32[128,32], index: 3, kind: input, shape index: {}]
  %s4 = inlined_call_operand.vmem [shape: f32[128,32], index: 4, kind: input, shape index: {}]
  %s5 = inlined_call_operand.vmem [shape: bf16[1,32,160], index: 5, kind: input, shape index: {}]
  %s6 = inlined_call_operand.vmem [shape: f32[1,1,160], index: 6, kind: input, shape index: {}]
  %s7 = inlined_call_operand.vmem [shape: bf16[1,32,32], index: 7, kind: input, shape index: {}]
  %s8 = inlined_call_operand.vmem [shape: f32[1,1,32], index: 8, kind: input, shape index: {}]
  %s9 = inlined_call_operand.vmem [shape: f32[1,2,32], index: 9, kind: input, shape index: {}]
  %s10 = inlined_call_operand.vmem [shape: bf16[1,32,256], index: 10, kind: input, shape index: {}]
  %s11 = inlined_call_operand.vmem [shape: bf16[1,128,32], index: 11, kind: input, shape index: {}]
  %s12 = inlined_call_operand.hbm [shape: f32[32,32], index: 12, kind: output, shape index: {}]
  %s13 = sld [smem:[#allocation0]]
  $region66: #{tpu_custom_call.1} parent=0
    _
  %s15 = ssub.s32 1, %s13
  %s16 = scalar_select 0, %s15, %s13
  $region1: #{tpu_custom_call.1} parent=0
    #allocation3 [shape = 'u8[16384]{0}', space=vmem, size = 0x4000, scoped, tag = 'output window, operand 0, single buffered']
    #allocation4 [shape = 's32[1]{0}', space=sflag, size = 0x4, scoped, tag = 'scoped memory for tpu_custom_call.1']
    %17 = vsyncpa [#allocation4], 0
    // Predicated region
    $region2: #{tpu_custom_call.1} parent=1 // pred_check
      _
    $region3: #{tpu_custom_call.1} parent=1 // pred_check_branch
      %19 = sbr.rel (0) target = $region5
    $region4: #{tpu_custom_call.1} parent=1 // pred_region
      _
    $region5: #{tpu_custom_call.1} parent=1 // pred_fallthru
      _
    // Predicated region
    $region6: #{tpu_custom_call.1} parent=1 // pred_check
      _
    $region7: #{tpu_custom_call.1} parent=1 // pred_check_branch
      %21 = sbr.rel (0) target = $region9
    $region8: #{tpu_custom_call.1} parent=1 // pred_region
      _
    $region9: #{tpu_custom_call.1} parent=1 // pred_fallthru
      _
    // Predicated region
    $region10: #{tpu_custom_call.1} parent=1 // pred_check
      _
    $region11: #{tpu_custom_call.1} parent=1 // pred_check_branch
      %23 = sbr.rel (0) target = $region13
    $region12: #{tpu_custom_call.1} parent=1 // pred_region
      _
    $region13: #{tpu_custom_call.1} parent=1 // pred_fallthru
      _
    // Predicated region
    $region14: #{tpu_custom_call.1} parent=1 // pred_check
      _
    $region15: #{tpu_custom_call.1} parent=1 // pred_check_branch
      %25 = sbr.rel (0) target = $region17
    $region16: #{tpu_custom_call.1} parent=1 // pred_region
      _
    $region17: #{tpu_custom_call.1} parent=1 // pred_fallthru
      _
    // Predicated region
    $region18: #{tpu_custom_call.1} parent=1 // pred_check
      _
    $region19: #{tpu_custom_call.1} parent=1 // pred_check_branch
      %27 = sbr.rel (0) target = $region21
    $region20: #{tpu_custom_call.1} parent=1 // pred_region
      _
    $region21: #{tpu_custom_call.1} parent=1 // pred_fallthru
      _
    // Predicated region
    $region22: #{tpu_custom_call.1} parent=1 // pred_check
      _
    $region23: #{tpu_custom_call.1} parent=1 // pred_check_branch
      %29 = sbr.rel (0) target = $region25
    $region24: #{tpu_custom_call.1} parent=1 // pred_region
      _
    $region25: #{tpu_custom_call.1} parent=1 // pred_fallthru
      _
    // Predicated region
    $region26: #{tpu_custom_call.1} parent=1 // pred_check
      _
    $region27: #{tpu_custom_call.1} parent=1 // pred_check_branch
      %31 = sbr.rel (0) target = $region29
    $region28: #{tpu_custom_call.1} parent=1 // pred_region
      _
    $region29: #{tpu_custom_call.1} parent=1 // pred_fallthru
      _
    // Predicated region
    $region30: #{tpu_custom_call.1} parent=1 // pred_check
      _
    $region31: #{tpu_custom_call.1} parent=1 // pred_check_branch
      %33 = sbr.rel (0) target = $region33
    $region32: #{tpu_custom_call.1} parent=1 // pred_region
      _
    $region33: #{tpu_custom_call.1} parent=1 // pred_fallthru
      _
    // Predicated region
    $region34: #{tpu_custom_call.1} parent=1 // pred_check
      _
    $region35: #{tpu_custom_call.1} parent=1 // pred_check_branch
      %35 = sbr.rel (0) target = $region37
    $region36: #{tpu_custom_call.1} parent=1 // pred_region
      _
    $region37: #{tpu_custom_call.1} parent=1 // pred_fallthru
      _
    // Predicated region
    $region38: #{tpu_custom_call.1} parent=1 // pred_check
      _
    $region39: #{tpu_custom_call.1} parent=1 // pred_check_branch
      %37 = sbr.rel (0) target = $region41
    $region40: #{tpu_custom_call.1} parent=1 // pred_region
      _
    $region41: #{tpu_custom_call.1} parent=1 // pred_fallthru
      _
    // Predicated region
    $region42: #{tpu_custom_call.1} parent=1 // pred_check
      _
    $region43: #{tpu_custom_call.1} parent=1 // pred_check_branch
      %39 = sbr.rel (0) target = $region45
    $region44: #{tpu_custom_call.1} parent=1 // pred_region
      _
    $region45: #{tpu_custom_call.1} parent=1 // pred_fallthru
      _
    // Predicated region
    $region46: #{tpu_custom_call.1} parent=1 // pred_check
      _
    $region47: #{tpu_custom_call.1} parent=1 // pred_check_branch
      %41 = sbr.rel (0) target = $region49
    $region48: #{tpu_custom_call.1} parent=1 // pred_region
      _
    $region49: #{tpu_custom_call.1} parent=1 // pred_fallthru
      _
    %p43 = scmp.eq.s32.totalorder 0, 0
    // Predicated region
    $region50: #{tpu_custom_call.1} parent=1 // pred_check
      %p44 = pneg %p43
    $region51: #{tpu_custom_call.1} parent=1 // pred_check_branch
      %46 = sbr.rel (%p44) target = $region53
    $region52: #{tpu_custom_call.1} parent=1 // pred_region
      %v47 = vld [vmem:[%s0] sm:$0xff]
      %v48 = vld [vmem:[%s0 + $0x8] sm:$0xff]
      %v49 = vld [vmem:[%s0 + $0x10] sm:$0xff]
      %v50 = vld [vmem:[%s0 + $0x18] sm:$0xff]
      %vm51 = vcmask 261120
      %52 = vst.msk [vmem:[#allocation2] sm:$0xff] %vm51, %v47
      %53 = vst.msk [vmem:[#allocation2 + $0x8] sm:$0xff] %vm51, %v48
      %54 = vst.msk [vmem:[#allocation2 + $0x10] sm:$0xff] %vm51, %v49
      %55 = vst.msk [vmem:[#allocation2 + $0x18] sm:$0xff] %vm51, %v50
    $region53: #{tpu_custom_call.1} parent=1 // pred_fallthru
      _
    %v56 = vld [vmem:[#allocation2] sm:$0xff]
    %v57 = vld [vmem:[#allocation2 + $0x8] sm:$0xff]
    %v58 = vld [vmem:[#allocation2 + $0x10] sm:$0xff]
    %v59 = vld [vmem:[#allocation2 + $0x18] sm:$0xff]
    %v60 = vld [vmem:[%s9] sm:$0x3]
    %v61 = vmul.f32 %v56, %v56
    %v62 = vmul.f32 %v57, %v57
    %v63 = vmul.f32 %v58, %v58
    %v64 = vmul.f32 %v59, %v59
    %vm65 = vcmask 261120
    %v66 = vsel %vm65, %v61, 0.0
    %67 = vadd.xlane.f32.xlu0 %v66
    %v68 = vpop.xlane.xlu0 %67
    %v69 = vsel %vm65, %v62, 0.0
    %70 = vadd.xlane.f32.xlu0 %v69
    %v71 = vpop.xlane.xlu0 %70
    %v72 = vsel %vm65, %v63, 0.0
    %73 = vadd.xlane.f32.xlu0 %v72
    %v74 = vpop.xlane.xlu0 %73
    %v75 = vsel %vm65, %v64, 0.0
    %76 = vadd.xlane.f32.xlu0 %v75
    %v77 = vpop.xlane.xlu0 %76
    %v78 = vrcp.pop 32.0
    %v79 = vmul.f32 %v68, %v78
    %v80 = vmul.f32 %v71, %v78
    %v81 = vmul.f32 %v74, %v78
    %v82 = vmul.f32 %v77, %v78
    %v83 = vadd.f32 %v79, 1e-05
    %v84 = vadd.f32 %v80, 1e-05
    %v85 = vadd.f32 %v81, 1e-05
    %v86 = vadd.f32 %v82, 1e-05
    %v87 = vrsqrt.pop %v83
    %v88 = vrsqrt.pop %v84
    %v89 = vrsqrt.pop %v85
    %v90 = vrsqrt.pop %v86
    %v91 = vmul.f32 %v56, %v87
    %v92 = vmul.f32 %v57, %v88
    %v93 = vmul.f32 %v58, %v89
    %v94 = vmul.f32 %v59, %v90
    %v95 = vlaneseq
    %v96 = vshrl.u32 %v95, 7
    %v97 = vsub.s32 0, %v96
    %v98 = vrot.slane %v60, %v97
    %v99 = vmul.f32 %v91, %v98
    %v100 = vmul.f32 %v92, %v98
    %v101 = vmul.f32 %v93, %v98
    %v102 = vmul.f32 %v94, %v98
    %v103 = vpack.c.bf16 %v57, %v56
    %v104 = vpack.c.bf16 %v59, %v58
    %v105 = vld [vmem:[%s5] sm:$0xff]
    %v106 = vld [vmem:[%s5 + $0x8] sm:$0xff]
    %v107 = vld [vmem:[%s5 + $0x10] sm:$0xff]
    %v108 = vld [vmem:[%s5 + $0x18] sm:$0xff]
    %v109 = vld [vmem:[%s6] sm:$0x3]
    %v111 = vlaneseq
    %v112 = vshrl.u32 %v111, 7
    %v113 = vsub.s32 0, %v112
    %v114 = vrot.slane %v109, %v113
    %v115 = vlaneseq
    %v116 = vshrl.u32 %v115, 7
    %v117 = vsub.s32 1, %v116
    %v118 = vrot.slane %v109, %v117
    %v125 = vunpack.c.l.b16 %v105
    %v126 = vunpack.c.h.b16 %v105
    %v127 = vunpack.c.l.b16 %v106
    %v128 = vunpack.c.h.b16 %v106
    %v129 = vunpack.c.l.b16 %v107
    %v130 = vunpack.c.h.b16 %v107
    %v131 = vunpack.c.l.b16 %v108
    %v132 = vunpack.c.h.b16 %v108
    %v133 = vpack.c.b16 %v127, %v125
    %v134 = vpack.c.b16 %v128, %v126
    %v135 = vpack.c.b16 %v131, %v129
    %v136 = vpack.c.b16 %v132, %v130
    %v142 = vsel %vm65, %v103, 0
    %v145 = vsel %vm65, %v104, 0
    %147 = vmatprep.subr.bf16.mxu0 0
    %148 = vmatpush1.bf16.msra.mxu0 0
    %149 = vmatprep.subr.bf16.mxu0 0
    %150 = vmatpush1.bf16.msra.mxu0 0
    %151 = vmatprep.subr.bf16.mxu0 0
    %152 = vmatpush1.bf16.msra.mxu0 0
    %153 = vmatprep.subr.bf16.mxu0 0
    %154 = vmatpush1.bf16.msra.mxu0 0
    %155 = vmatprep.subr.bf16.mxu0 0
    %156 = vmatpush1.bf16.msra.mxu0 0
    %157 = vmatprep.subr.bf16.mxu0 0
    %158 = vmatpush1.bf16.msra.mxu0 0
    %159 = vmatprep.subr.bf16.mxu0 %v136
    %160 = vmatpush1.bf16.msra.mxu0 %v135
    %161 = vmatprep.subr.bf16.mxu0 %v134
    %162 = vmatpush1.bf16.msra.mxu0 %v133
    %163 = vmatprep.subr.bf16.mxu0 0
    %164 = vmatpush2.bf16.msra.mxu0 0
    %165 = vmatprep.subr.bf16.mxu0 0
    %166 = vmatpush2.bf16.msra.mxu0 0
    %167 = vmatprep.subr.bf16.mxu0 0
    %168 = vmatpush2.bf16.msra.mxu0 0
    %169 = vmatprep.subr.bf16.mxu0 0
    %170 = vmatpush2.bf16.msra.mxu0 0
    %171 = vmatprep.subr.bf16.mxu0 0
    %172 = vmatpush2.bf16.msra.mxu0 0
    %173 = vmatprep.subr.bf16.mxu0 0
    %174 = vmatpush2.bf16.msra.mxu0 0
    %175 = vmatprep.subr.bf16.mxu0 0
    %176 = vmatpush2.bf16.msra.mxu0 0
    %177 = vmatprep.subr.bf16.mxu0 0
    %178 = vmatpush2.bf16.msra.mxu0 0
    %179 = vmatprep.mubr.bf16.mxu0 0
    %180 = vmatmul.mubr.bf16.gmra.mxu0 %v142
    %v181 = vpop.f32.mrf.mxu0
    %v182 = vadd.f32 %v114, %v181
    %v183 = vpop.f32.mrf.mxu0
    %v184 = vadd.f32 %v118, %v183
    %v185 = vpop.f32.mrf.mxu0
    %v186 = vadd.f32 %v114, %v185
    %v187 = vpop.f32.mrf.mxu0
    %v188 = vadd.f32 %v118, %v187
    %189 = vmatprep.mubr.bf16.mxu0 0
    %190 = vmatmul.mubr.bf16.gmra.mxu0 %v145
    %v191 = vpop.f32.mrf.mxu0
    %v192 = vadd.f32 %v114, %v191
    %v193 = vpop.f32.mrf.mxu0
    %v194 = vadd.f32 %v118, %v193
    %v195 = vpop.f32.mrf.mxu0
    %v196 = vadd.f32 %v114, %v195
    %v197 = vpop.f32.mrf.mxu0
    %v198 = vadd.f32 %v118, %v197
    %199 = vdwg.mxu0
    %v200 = vld [vmem:[%s1] sm:$0xff]
    %v201 = vld [vmem:[%s1 + $0x8] sm:$0xff]
    %v202 = vld [vmem:[%s1 + $0x10] sm:$0xff]
    %v203 = vld [vmem:[%s1 + $0x18] sm:$0xff]
    %v204 = vld [vmem:[%s2] sm:$0xff]
    %v205 = vld [vmem:[%s2 + $0x8] sm:$0xff]
    %v206 = vld [vmem:[%s2 + $0x10] sm:$0xff]
    %v207 = vld [vmem:[%s2 + $0x18] sm:$0xff]
    %v208 = vmul.f32 %v182, %v200
    %v209 = vmul.f32 %v186, %v201
    %v210 = vmul.f32 %v192, %v202
    %v211 = vmul.f32 %v196, %v203
    %216 = vrot.lane.b32.xlu0 %v204, 96
    %v217 = vpop.permute.xlu0 %216
    %218 = vrot.lane.b32.xlu0 %v205, 96
    %v219 = vpop.permute.xlu0 %218
    %220 = vrot.lane.b32.xlu0 %v206, 96
    %v221 = vpop.permute.xlu0 %220
    %222 = vrot.lane.b32.xlu0 %v207, 96
    %v223 = vpop.permute.xlu0 %222
    %v228 = vmul.f32 %v182, %v217
    %v229 = vmul.f32 %v186, %v219
    %v230 = vmul.f32 %v192, %v221
    %v231 = vmul.f32 %v196, %v223
    %236 = vrot.lane.b32.xlu0 %v228, 32
    %v237 = vpop.permute.xlu0 %236
    %238 = vrot.lane.b32.xlu0 %v229, 32
    %v239 = vpop.permute.xlu0 %238
    %240 = vrot.lane.b32.xlu0 %v230, 32
    %v241 = vpop.permute.xlu0 %240
    %242 = vrot.lane.b32.xlu0 %v231, 32
    %v243 = vpop.permute.xlu0 %242
    %v248 = vadd.f32 %v208, %v237
    %v249 = vadd.f32 %v209, %v239
    %v250 = vadd.f32 %v210, %v241
    %v251 = vadd.f32 %v211, %v243
    %256 = vrot.lane.b32.xlu0 %v200, 32
    %v257 = vpop.permute.xlu0 %256
    %258 = vrot.lane.b32.xlu0 %v201, 32
    %v259 = vpop.permute.xlu0 %258
    %260 = vrot.lane.b32.xlu0 %v202, 32
    %v261 = vpop.permute.xlu0 %260
    %262 = vrot.lane.b32.xlu0 %v203, 32
    %v263 = vpop.permute.xlu0 %262
    %v268 = vmul.f32 %v182, %v257
    %v269 = vmul.f32 %v186, %v259
    %v270 = vmul.f32 %v192, %v261
    %v271 = vmul.f32 %v196, %v263
    %v272 = vmul.f32 %v184, %v204
    %v273 = vmul.f32 %v188, %v205
    %v274 = vmul.f32 %v194, %v206
    %v275 = vmul.f32 %v198, %v207
    %280 = vrot.lane.b32.xlu0 %v272, 32
    %v281 = vpop.permute.xlu0 %280
    %282 = vrot.lane.b32.xlu0 %v273, 32
    %v283 = vpop.permute.xlu0 %282
    %284 = vrot.lane.b32.xlu0 %v274, 32
    %v285 = vpop.permute.xlu0 %284
    %286 = vrot.lane.b32.xlu0 %v275, 32
    %v287 = vpop.permute.xlu0 %286
    %v292 = vadd.f32 %v268, %v281
    %v293 = vadd.f32 %v269, %v283
    %v294 = vadd.f32 %v270, %v285
    %v295 = vadd.f32 %v271, %v287
    %v296 = vld [vmem:[%s3] sm:$0xff]
    %v297 = vld [vmem:[%s3 + $0x8] sm:$0xff]
    %v298 = vld [vmem:[%s3 + $0x10] sm:$0xff]
    %v299 = vld [vmem:[%s3 + $0x18] sm:$0xff]
    %v300 = vld [vmem:[%s3 + $0x20] sm:$0xff]
    %v301 = vld [vmem:[%s3 + $0x28] sm:$0xff]
    %v302 = vld [vmem:[%s3 + $0x30] sm:$0xff]
    %v303 = vld [vmem:[%s3 + $0x38] sm:$0xff]
    %v304 = vld [vmem:[%s3 + $0x40] sm:$0xff]
    %v305 = vld [vmem:[%s3 + $0x48] sm:$0xff]
    %v306 = vld [vmem:[%s3 + $0x50] sm:$0xff]
    %v307 = vld [vmem:[%s3 + $0x58] sm:$0xff]
    %v308 = vld [vmem:[%s3 + $0x60] sm:$0xff]
    %v309 = vld [vmem:[%s3 + $0x68] sm:$0xff]
    %v310 = vld [vmem:[%s3 + $0x70] sm:$0xff]
    %v311 = vld [vmem:[%s3 + $0x78] sm:$0xff]
    %v312 = vmul.f32 %v248, %v296
    %v313 = vmul.f32 %v249, %v297
    %v314 = vmul.f32 %v250, %v298
    %v315 = vmul.f32 %v251, %v299
    %v316 = vmul.f32 %v248, %v300
    %v317 = vmul.f32 %v249, %v301
    %v318 = vmul.f32 %v250, %v302
    %v319 = vmul.f32 %v251, %v303
    %v320 = vmul.f32 %v248, %v304
    %v321 = vmul.f32 %v249, %v305
    %v322 = vmul.f32 %v250, %v306
    %v323 = vmul.f32 %v251, %v307
    %v324 = vmul.f32 %v248, %v308
    %v325 = vmul.f32 %v249, %v309
    %v326 = vmul.f32 %v250, %v310
    %v327 = vmul.f32 %v251, %v311
    %v328 = vpack.c.bf16 %v313, %v312
    %v329 = vpack.c.bf16 %v315, %v314
    %v330 = vpack.c.bf16 %v317, %v316
    %v331 = vpack.c.bf16 %v319, %v318
    %v332 = vpack.c.bf16 %v321, %v320
    %v333 = vpack.c.bf16 %v323, %v322
    %v334 = vpack.c.bf16 %v325, %v324
    %v335 = vpack.c.bf16 %v327, %v326
    %v336 = vpack.c.bf16 %v293, %v292
    %v337 = vpack.c.bf16 %v295, %v294
    %v338 = vld [vmem:[%s4] sm:$0xff]
    %v339 = vld [vmem:[%s4 + $0x8] sm:$0xff]
    %v340 = vld [vmem:[%s4 + $0x10] sm:$0xff]
    %v341 = vld [vmem:[%s4 + $0x18] sm:$0xff]
    %v342 = vld [vmem:[%s4 + $0x20] sm:$0xff]
    %v343 = vld [vmem:[%s4 + $0x28] sm:$0xff]
    %v344 = vld [vmem:[%s4 + $0x30] sm:$0xff]
    %v345 = vld [vmem:[%s4 + $0x38] sm:$0xff]
    %v346 = vld [vmem:[%s4 + $0x40] sm:$0xff]
    %v347 = vld [vmem:[%s4 + $0x48] sm:$0xff]
    %v348 = vld [vmem:[%s4 + $0x50] sm:$0xff]
    %v349 = vld [vmem:[%s4 + $0x58] sm:$0xff]
    %v350 = vld [vmem:[%s4 + $0x60] sm:$0xff]
    %v351 = vld [vmem:[%s4 + $0x68] sm:$0xff]
    %v352 = vld [vmem:[%s4 + $0x70] sm:$0xff]
    %v353 = vld [vmem:[%s4 + $0x78] sm:$0xff]
    %356 = vrot.lane.b32.xlu0 %v336, 96
    %v357 = vpop.permute.xlu0 %356
    %358 = vrot.lane.b32.xlu0 %v337, 96
    %v359 = vpop.permute.xlu0 %358
    %v361 = vsel %vm65, %v328, 0
    %v364 = vsel %vm65, %v329, 0
    %v367 = vsel %vm65, %v330, 0
    %v370 = vsel %vm65, %v331, 0
    %v373 = vsel %vm65, %v332, 0
    %v376 = vsel %vm65, %v333, 0
    %v379 = vsel %vm65, %v334, 0
    %v382 = vsel %vm65, %v335, 0
    %v385 = vsel %vm65, %v357, 0
    %v388 = vsel %vm65, %v359, 0
    %390 = vmatprep.subr.bf16.mxu0 0
    %391 = vmatpush1.bf16.xpose.msra.mxu0 0
    %392 = vmatprep.subr.bf16.mxu0 0
    %393 = vmatpush1.bf16.xpose.msra.mxu0 0
    %394 = vmatprep.subr.bf16.mxu0 0
    %395 = vmatpush1.bf16.xpose.msra.mxu0 0
    %396 = vmatprep.subr.bf16.mxu0 0
    %397 = vmatpush1.bf16.xpose.msra.mxu0 0
    %398 = vmatprep.subr.bf16.mxu0 0
    %399 = vmatpush1.bf16.xpose.msra.mxu0 0
    %400 = vmatprep.subr.bf16.mxu0 0
    %401 = vmatpush1.bf16.xpose.msra.mxu0 0
    %402 = vmatprep.subr.bf16.mxu0 0
    %403 = vmatpush1.bf16.xpose.msra.mxu0 %v388
    %404 = vmatprep.subr.bf16.mxu0 0
    %405 = vmatpush1.bf16.xpose.msra.mxu0 %v385
    %406 = vmatprep.subr.bf16.mxu0 0
    %407 = vmatpush2.bf16.xpose.msra.mxu0 0
    %408 = vmatprep.subr.bf16.mxu0 0
    %409 = vmatpush2.bf16.xpose.msra.mxu0 0
    %410 = vmatprep.subr.bf16.mxu0 0
    %411 = vmatpush2.bf16.xpose.msra.mxu0 0
    %412 = vmatprep.subr.bf16.mxu0 0
    %413 = vmatpush2.bf16.xpose.msra.mxu0 0
    %414 = vmatprep.subr.bf16.mxu0 0
    %415 = vmatpush2.bf16.xpose.msra.mxu0 0
    %416 = vmatprep.subr.bf16.mxu0 0
    %417 = vmatpush2.bf16.xpose.msra.mxu0 0
    %418 = vmatprep.subr.bf16.mxu0 0
    %419 = vmatpush2.bf16.xpose.msra.mxu0 0
    %420 = vmatprep.subr.bf16.mxu0 0
    %421 = vmatpush2.bf16.xpose.msra.mxu0 0
    %422 = vmatprep.mubr.bf16.mxu0 0
    %423 = vmatmul.mubr.bf16.gmra.mxu0 %v361
    %v424 = vpop.f32.mrf.mxu0
    %v425 = vadd.f32 %v338, %v424
    %v426 = vpop.f32.mrf.mxu0
    %v427 = vpop.f32.mrf.mxu0
    %v428 = vadd.f32 %v339, %v427
    %v429 = vpop.f32.mrf.mxu0
    %430 = vmatprep.mubr.bf16.mxu0 0
    %431 = vmatmul.mubr.bf16.gmra.mxu0 %v364
    %v432 = vpop.f32.mrf.mxu0
    %v433 = vadd.f32 %v340, %v432
    %v434 = vpop.f32.mrf.mxu0
    %v435 = vpop.f32.mrf.mxu0
    %v436 = vadd.f32 %v341, %v435
    %v437 = vpop.f32.mrf.mxu0
    %438 = vmatprep.mubr.bf16.mxu0 0
    %439 = vmatmul.mubr.bf16.gmra.mxu0 %v367
    %v440 = vpop.f32.mrf.mxu0
    %v441 = vadd.f32 %v342, %v440
    %v442 = vpop.f32.mrf.mxu0
    %v443 = vpop.f32.mrf.mxu0
    %v444 = vadd.f32 %v343, %v443
    %v445 = vpop.f32.mrf.mxu0
    %446 = vmatprep.mubr.bf16.mxu0 0
    %447 = vmatmul.mubr.bf16.gmra.mxu0 %v370
    %v448 = vpop.f32.mrf.mxu0
    %v449 = vadd.f32 %v344, %v448
    %v450 = vpop.f32.mrf.mxu0
    %v451 = vpop.f32.mrf.mxu0
    %v452 = vadd.f32 %v345, %v451
    %v453 = vpop.f32.mrf.mxu0
    %454 = vmatprep.mubr.bf16.mxu0 0
    %455 = vmatmul.mubr.bf16.gmra.mxu0 %v373
    %v456 = vpop.f32.mrf.mxu0
    %v457 = vadd.f32 %v346, %v456
    %v458 = vpop.f32.mrf.mxu0
    %v459 = vpop.f32.mrf.mxu0
    %v460 = vadd.f32 %v347, %v459
    %v461 = vpop.f32.mrf.mxu0
    %462 = vmatprep.mubr.bf16.mxu0 0
    %463 = vmatmul.mubr.bf16.gmra.mxu0 %v376
    %v464 = vpop.f32.mrf.mxu0
    %v465 = vadd.f32 %v348, %v464
    %v466 = vpop.f32.mrf.mxu0
    %v467 = vpop.f32.mrf.mxu0
    %v468 = vadd.f32 %v349, %v467
    %v469 = vpop.f32.mrf.mxu0
    %470 = vmatprep.mubr.bf16.mxu0 0
    %471 = vmatmul.mubr.bf16.gmra.mxu0 %v379
    %v472 = vpop.f32.mrf.mxu0
    %v473 = vadd.f32 %v350, %v472
    %v474 = vpop.f32.mrf.mxu0
    %v475 = vpop.f32.mrf.mxu0
    %v476 = vadd.f32 %v351, %v475
    %v477 = vpop.f32.mrf.mxu0
    %478 = vmatprep.mubr.bf16.mxu0 0
    %479 = vmatmul.mubr.bf16.gmra.mxu0 %v382
    %v480 = vpop.f32.mrf.mxu0
    %v481 = vadd.f32 %v352, %v480
    %v482 = vpop.f32.mrf.mxu0
    %v483 = vpop.f32.mrf.mxu0
    %v484 = vadd.f32 %v353, %v483
    %v485 = vpop.f32.mrf.mxu0
    %486 = vdwg.mxu0
    %v487 = vsel %vm65, %v425, -inf
    %488 = vmax.xlane.f32.xlu0 %v487
    %v489 = vpop.xlane.xlu0 %488
    %v490 = vsel %vm65, %v428, -inf
    %491 = vmax.xlane.f32.xlu0 %v490
    %v492 = vpop.xlane.xlu0 %491
    %v493 = vsel %vm65, %v433, -inf
    %494 = vmax.xlane.f32.xlu0 %v493
    %v495 = vpop.xlane.xlu0 %494
    %v496 = vsel %vm65, %v436, -inf
    %497 = vmax.xlane.f32.xlu0 %v496
    %v498 = vpop.xlane.xlu0 %497
    %v499 = vsel %vm65, %v441, -inf
    %500 = vmax.xlane.f32.xlu0 %v499
    %v501 = vpop.xlane.xlu0 %500
    %v502 = vsel %vm65, %v444, -inf
    %503 = vmax.xlane.f32.xlu0 %v502
    %v504 = vpop.xlane.xlu0 %503
    %v505 = vsel %vm65, %v449, -inf
    %506 = vmax.xlane.f32.xlu0 %v505
    %v507 = vpop.xlane.xlu0 %506
    %v508 = vsel %vm65, %v452, -inf
    %509 = vmax.xlane.f32.xlu0 %v508
    %v510 = vpop.xlane.xlu0 %509
    %v511 = vsel %vm65, %v457, -inf
    %512 = vmax.xlane.f32.xlu0 %v511
    %v513 = vpop.xlane.xlu0 %512
    %v514 = vsel %vm65, %v460, -inf
    %515 = vmax.xlane.f32.xlu0 %v514
    %v516 = vpop.xlane.xlu0 %515
    %v517 = vsel %vm65, %v465, -inf
    %518 = vmax.xlane.f32.xlu0 %v517
    %v519 = vpop.xlane.xlu0 %518
    %v520 = vsel %vm65, %v468, -inf
    %521 = vmax.xlane.f32.xlu0 %v520
    %v522 = vpop.xlane.xlu0 %521
    %v523 = vsel %vm65, %v473, -inf
    %524 = vmax.xlane.f32.xlu0 %v523
    %v525 = vpop.xlane.xlu0 %524
    %v526 = vsel %vm65, %v476, -inf
    %527 = vmax.xlane.f32.xlu0 %v526
    %v528 = vpop.xlane.xlu0 %527
    %v529 = vsel %vm65, %v481, -inf
    %530 = vmax.xlane.f32.xlu0 %v529
    %v531 = vpop.xlane.xlu0 %530
    %v532 = vsel %vm65, %v484, -inf
    %533 = vmax.xlane.f32.xlu0 %v532
    %v534 = vpop.xlane.xlu0 %533
    %v535 = vsub.f32 %v425, %v489
    %v536 = vsub.f32 %v428, %v492
    %v537 = vsub.f32 %v433, %v495
    %v538 = vsub.f32 %v436, %v498
    %v539 = vsub.f32 %v441, %v501
    %v540 = vsub.f32 %v444, %v504
    %v541 = vsub.f32 %v449, %v507
    %v542 = vsub.f32 %v452, %v510
    %v543 = vsub.f32 %v457, %v513
    %v544 = vsub.f32 %v460, %v516
    %v545 = vsub.f32 %v465, %v519
    %v546 = vsub.f32 %v468, %v522
    %v547 = vsub.f32 %v473, %v525
    %v548 = vsub.f32 %v476, %v528
    %v549 = vsub.f32 %v481, %v531
    %v550 = vsub.f32 %v484, %v534
    %v551 = vmul.f32 %v535, 1.442695
    %v552 = vpow.pop %v551
    %v553 = vmul.f32 %v536, 1.442695
    %v554 = vpow.pop %v553
    %v555 = vmul.f32 %v537, 1.442695
    %v556 = vpow.pop %v555
    %v557 = vmul.f32 %v538, 1.442695
    %v558 = vpow.pop %v557
    %v559 = vmul.f32 %v539, 1.442695
    %v560 = vpow.pop %v559
    %v561 = vmul.f32 %v540, 1.442695
    %v562 = vpow.pop %v561
    %v563 = vmul.f32 %v541, 1.442695
    %v564 = vpow.pop %v563
    %v565 = vmul.f32 %v542, 1.442695
    %v566 = vpow.pop %v565
    %v567 = vmul.f32 %v543, 1.442695
    %v568 = vpow.pop %v567
    %v569 = vmul.f32 %v544, 1.442695
    %v570 = vpow.pop %v569
    %v571 = vmul.f32 %v545, 1.442695
    %v572 = vpow.pop %v571
    %v573 = vmul.f32 %v546, 1.442695
    %v574 = vpow.pop %v573
    %v575 = vmul.f32 %v547, 1.442695
    %v576 = vpow.pop %v575
    %v577 = vmul.f32 %v548, 1.442695
    %v578 = vpow.pop %v577
    %v579 = vmul.f32 %v549, 1.442695
    %v580 = vpow.pop %v579
    %v581 = vmul.f32 %v550, 1.442695
    %v582 = vpow.pop %v581
    %v583 = vsel %vm65, %v552, 0.0
    %584 = vadd.xlane.f32.xlu0 %v583
    %v585 = vpop.xlane.xlu0 %584
    %v586 = vsel %vm65, %v554, 0.0
    %587 = vadd.xlane.f32.xlu0 %v586
    %v588 = vpop.xlane.xlu0 %587
    %v589 = vsel %vm65, %v556, 0.0
    %590 = vadd.xlane.f32.xlu0 %v589
    %v591 = vpop.xlane.xlu0 %590
    %v592 = vsel %vm65, %v558, 0.0
    %593 = vadd.xlane.f32.xlu0 %v592
    %v594 = vpop.xlane.xlu0 %593
    %v595 = vsel %vm65, %v560, 0.0
    %596 = vadd.xlane.f32.xlu0 %v595
    %v597 = vpop.xlane.xlu0 %596
    %v598 = vsel %vm65, %v562, 0.0
    %599 = vadd.xlane.f32.xlu0 %v598
    %v600 = vpop.xlane.xlu0 %599
    %v601 = vsel %vm65, %v564, 0.0
    %602 = vadd.xlane.f32.xlu0 %v601
    %v603 = vpop.xlane.xlu0 %602
    %v604 = vsel %vm65, %v566, 0.0
    %605 = vadd.xlane.f32.xlu0 %v604
    %v606 = vpop.xlane.xlu0 %605
    %v607 = vsel %vm65, %v568, 0.0
    %608 = vadd.xlane.f32.xlu0 %v607
    %v609 = vpop.xlane.xlu0 %608
    %v610 = vsel %vm65, %v570, 0.0
    %611 = vadd.xlane.f32.xlu0 %v610
    %v612 = vpop.xlane.xlu0 %611
    %v613 = vsel %vm65, %v572, 0.0
    %614 = vadd.xlane.f32.xlu0 %v613
    %v615 = vpop.xlane.xlu0 %614
    %v616 = vsel %vm65, %v574, 0.0
    %617 = vadd.xlane.f32.xlu0 %v616
    %v618 = vpop.xlane.xlu0 %617
    %v619 = vsel %vm65, %v576, 0.0
    %620 = vadd.xlane.f32.xlu0 %v619
    %v621 = vpop.xlane.xlu0 %620
    %v622 = vsel %vm65, %v578, 0.0
    %623 = vadd.xlane.f32.xlu0 %v622
    %v624 = vpop.xlane.xlu0 %623
    %v625 = vsel %vm65, %v580, 0.0
    %626 = vadd.xlane.f32.xlu0 %v625
    %v627 = vpop.xlane.xlu0 %626
    %v628 = vsel %vm65, %v582, 0.0
    %629 = vadd.xlane.f32.xlu0 %v628
    %v630 = vpop.xlane.xlu0 %629
    %v631 = vrcp.pop %v585
    %v632 = vrcp.pop %v588
    %v633 = vrcp.pop %v591
    %v634 = vrcp.pop %v594
    %v635 = vrcp.pop %v597
    %v636 = vrcp.pop %v600
    %v637 = vrcp.pop %v603
    %v638 = vrcp.pop %v606
    %v639 = vrcp.pop %v609
    %v640 = vrcp.pop %v612
    %v641 = vrcp.pop %v615
    %v642 = vrcp.pop %v618
    %v643 = vrcp.pop %v621
    %v644 = vrcp.pop %v624
    %v645 = vrcp.pop %v627
    %v646 = vrcp.pop %v630
    %v647 = vmul.f32 %v552, %v631
    %v648 = vmul.f32 %v554, %v632
    %v649 = vmul.f32 %v556, %v633
    %v650 = vmul.f32 %v558, %v634
    %v651 = vmul.f32 %v560, %v635
    %v652 = vmul.f32 %v562, %v636
    %v653 = vmul.f32 %v564, %v637
    %v654 = vmul.f32 %v566, %v638
    %v655 = vmul.f32 %v568, %v639
    %v656 = vmul.f32 %v570, %v640
    %v657 = vmul.f32 %v572, %v641
    %v658 = vmul.f32 %v574, %v642
    %v659 = vmul.f32 %v576, %v643
    %v660 = vmul.f32 %v578, %v644
    %v661 = vmul.f32 %v580, %v645
    %v662 = vmul.f32 %v582, %v646
    %v663 = vpack.c.bf16 %v648, %v647
    %v664 = vpack.c.bf16 %v650, %v649
    %v665 = vpack.c.bf16 %v652, %v651
    %v666 = vpack.c.bf16 %v654, %v653
    %v667 = vpack.c.bf16 %v656, %v655
    %v668 = vpack.c.bf16 %v658, %v657
    %v669 = vpack.c.bf16 %v660, %v659
    %v670 = vpack.c.bf16 %v662, %v661
    %v671 = vpack.c.bf16 %v186, %v182
    %v672 = vpack.c.bf16 %v196, %v192
    %675 = vrot.lane.b32.xlu0 %v671, 64
    %v676 = vpop.permute.xlu0 %675
    %677 = vrot.lane.b32.xlu0 %v672, 64
    %v678 = vpop.permute.xlu0 %677
    %v682 = vsel %vm65, %v663, 0
    %v685 = vsel %vm65, %v664, 0
    %v688 = vsel %vm65, %v665, 0
    %v691 = vsel %vm65, %v666, 0
    %v694 = vsel %vm65, %v667, 0
    %v697 = vsel %vm65, %v668, 0
    %v700 = vsel %vm65, %v669, 0
    %v703 = vsel %vm65, %v670, 0
    %705 = vmatprep.subr.bf16.mxu0 0
    %706 = vmatpush1.bf16.msra.mxu0 0
    %707 = vmatprep.subr.bf16.mxu0 0
    %708 = vmatpush1.bf16.msra.mxu0 0
    %709 = vmatprep.subr.bf16.mxu0 0
    %710 = vmatpush1.bf16.msra.mxu0 0
    %711 = vmatprep.subr.bf16.mxu0 0
    %712 = vmatpush1.bf16.msra.mxu0 0
    %713 = vmatprep.subr.bf16.mxu0 0
    %714 = vmatpush1.bf16.msra.mxu0 0
    %715 = vmatprep.subr.bf16.mxu0 0
    %716 = vmatpush1.bf16.msra.mxu0 0
    %717 = vmatprep.subr.bf16.mxu0 0
    %718 = vmatpush1.bf16.msra.mxu0 %v678
    %719 = vmatprep.subr.bf16.mxu0 0
    %720 = vmatpush1.bf16.msra.mxu0 %v676
    %721 = vmatprep.subr.bf16.mxu0 0
    %722 = vmatpush2.bf16.msra.mxu0 0
    %723 = vmatprep.subr.bf16.mxu0 0
    %724 = vmatpush2.bf16.msra.mxu0 0
    %725 = vmatprep.subr.bf16.mxu0 0
    %726 = vmatpush2.bf16.msra.mxu0 0
    %727 = vmatprep.subr.bf16.mxu0 0
    %728 = vmatpush2.bf16.msra.mxu0 0
    %729 = vmatprep.subr.bf16.mxu0 0
    %730 = vmatpush2.bf16.msra.mxu0 0
    %731 = vmatprep.subr.bf16.mxu0 0
    %732 = vmatpush2.bf16.msra.mxu0 0
    %733 = vmatprep.subr.bf16.mxu0 0
    %734 = vmatpush2.bf16.msra.mxu0 0
    %735 = vmatprep.subr.bf16.mxu0 0
    %736 = vmatpush2.bf16.msra.mxu0 0
    %737 = vmatprep.mubr.bf16.mxu0 0
    %738 = vmatmul.mubr.bf16.gmra.mxu0 %v682
    %v739 = vpop.f32.mrf.mxu0
    %v740 = vadd.f32 0.0, %v739
    %v741 = vpop.f32.mrf.mxu0
    %v742 = vpop.f32.mrf.mxu0
    %v743 = vadd.f32 0.0, %v742
    %v744 = vpop.f32.mrf.mxu0
    %745 = vmatprep.mubr.bf16.mxu0 0
    %746 = vmatmul.mubr.bf16.gmra.mxu0 %v685
    %v747 = vpop.f32.mrf.mxu0
    %v748 = vadd.f32 0.0, %v747
    %v749 = vpop.f32.mrf.mxu0
    %v750 = vpop.f32.mrf.mxu0
    %v751 = vadd.f32 0.0, %v750
    %v752 = vpop.f32.mrf.mxu0
    %753 = vmatprep.mubr.bf16.mxu0 0
    %754 = vmatmul.mubr.bf16.gmra.mxu0 %v688
    %v755 = vpop.f32.mrf.mxu0
    %v756 = vadd.f32 0.0, %v755
    %v757 = vpop.f32.mrf.mxu0
    %v758 = vpop.f32.mrf.mxu0
    %v759 = vadd.f32 0.0, %v758
    %v760 = vpop.f32.mrf.mxu0
    %761 = vmatprep.mubr.bf16.mxu0 0
    %762 = vmatmul.mubr.bf16.gmra.mxu0 %v691
    %v763 = vpop.f32.mrf.mxu0
    %v764 = vadd.f32 0.0, %v763
    %v765 = vpop.f32.mrf.mxu0
    %v766 = vpop.f32.mrf.mxu0
    %v767 = vadd.f32 0.0, %v766
    %v768 = vpop.f32.mrf.mxu0
    %769 = vmatprep.mubr.bf16.mxu0 0
    %770 = vmatmul.mubr.bf16.gmra.mxu0 %v694
    %v771 = vpop.f32.mrf.mxu0
    %v772 = vadd.f32 0.0, %v771
    %v773 = vpop.f32.mrf.mxu0
    %v774 = vpop.f32.mrf.mxu0
    %v775 = vadd.f32 0.0, %v774
    %v776 = vpop.f32.mrf.mxu0
    %777 = vmatprep.mubr.bf16.mxu0 0
    %778 = vmatmul.mubr.bf16.gmra.mxu0 %v697
    %v779 = vpop.f32.mrf.mxu0
    %v780 = vadd.f32 0.0, %v779
    %v781 = vpop.f32.mrf.mxu0
    %v782 = vpop.f32.mrf.mxu0
    %v783 = vadd.f32 0.0, %v782
    %v784 = vpop.f32.mrf.mxu0
    %785 = vmatprep.mubr.bf16.mxu0 0
    %786 = vmatmul.mubr.bf16.gmra.mxu0 %v700
    %v787 = vpop.f32.mrf.mxu0
    %v788 = vadd.f32 0.0, %v787
    %v789 = vpop.f32.mrf.mxu0
    %v790 = vpop.f32.mrf.mxu0
    %v791 = vadd.f32 0.0, %v790
    %v792 = vpop.f32.mrf.mxu0
    %793 = vmatprep.mubr.bf16.mxu0 0
    %794 = vmatmul.mubr.bf16.gmra.mxu0 %v703
    %v795 = vpop.f32.mrf.mxu0
    %v796 = vadd.f32 0.0, %v795
    %v797 = vpop.f32.mrf.mxu0
    %v798 = vpop.f32.mrf.mxu0
    %v799 = vadd.f32 0.0, %v798
    %v800 = vpop.f32.mrf.mxu0
    %801 = vdwg.mxu0
    %v802 = vmul.f32 %v740, %v296
    %v803 = vmul.f32 %v743, %v297
    %v804 = vmul.f32 %v748, %v298
    %v805 = vmul.f32 %v751, %v299
    %v806 = vmul.f32 %v756, %v300
    %v807 = vmul.f32 %v759, %v301
    %v808 = vmul.f32 %v764, %v302
    %v809 = vmul.f32 %v767, %v303
    %v810 = vmul.f32 %v772, %v304
    %v811 = vmul.f32 %v775, %v305
    %v812 = vmul.f32 %v780, %v306
    %v813 = vmul.f32 %v783, %v307
    %v814 = vmul.f32 %v788, %v308
    %v815 = vmul.f32 %v791, %v309
    %v816 = vmul.f32 %v796, %v310
    %v817 = vmul.f32 %v799, %v311
    %v818 = vadd.f32 %v802, %v806
    %v819 = vadd.f32 %v803, %v807
    %v820 = vadd.f32 %v804, %v808
    %v821 = vadd.f32 %v805, %v809
    %v822 = vadd.f32 %v818, %v810
    %v823 = vadd.f32 %v819, %v811
    %v824 = vadd.f32 %v820, %v812
    %v825 = vadd.f32 %v821, %v813
    %v826 = vadd.f32 %v822, %v814
    %v827 = vadd.f32 %v823, %v815
    %v828 = vadd.f32 %v824, %v816
    %v829 = vadd.f32 %v825, %v817
    %v830 = vpack.c.bf16 %v827, %v826
    %v831 = vpack.c.bf16 %v829, %v828
    %v832 = vld [vmem:[%s7] sm:$0xf]
    %v833 = vld [vmem:[%s7 + $0x4] sm:$0xf]
    %v834 = vld [vmem:[%s7 + $0x8] sm:$0xf]
    %v835 = vld [vmem:[%s7 + $0xc] sm:$0xf]
    %v836 = vld [vmem:[%s8] sm:$0x1]
    %v838 = vlaneseq
    %v839 = vshrl.u32 %v838, 7
    %v840 = vsub.s32 0, %v839
    %v841 = vrot.slane %v836, %v840
    %v847 = vunpack.c.l.b16 %v832
    %v848 = vunpack.c.l.b16 %v833
    %v849 = vunpack.c.l.b16 %v834
    %v850 = vunpack.c.l.b16 %v835
    %v851 = vpack.c.b16 %v848, %v847
    %v852 = vpack.c.b16 %v850, %v849
    %v856 = vsel %vm65, %v830, 0
    %v859 = vsel %vm65, %v831, 0
    %861 = vmatprep.subr.bf16.mxu0 0
    %862 = vmatpush1.bf16.msra.mxu0 0
    %863 = vmatprep.subr.bf16.mxu0 0
    %864 = vmatpush1.bf16.msra.mxu0 0
    %865 = vmatprep.subr.bf16.mxu0 0
    %866 = vmatpush1.bf16.msra.mxu0 0
    %867 = vmatprep.subr.bf16.mxu0 0
    %868 = vmatpush1.bf16.msra.mxu0 0
    %869 = vmatprep.subr.bf16.mxu0 0
    %870 = vmatpush1.bf16.msra.mxu0 0
    %871 = vmatprep.subr.bf16.mxu0 0
    %872 = vmatpush1.bf16.msra.mxu0 0
    %873 = vmatprep.subr.bf16.mxu0 0
    %874 = vmatpush1.bf16.msra.mxu0 %v852
    %875 = vmatprep.subr.bf16.mxu0 0
    %876 = vmatpush1.bf16.msra.mxu0 %v851
    %877 = vmatprep.subr.bf16.mxu0 0
    %878 = vmatpush2.bf16.msra.mxu0 0
    %879 = vmatprep.subr.bf16.mxu0 0
    %880 = vmatpush2.bf16.msra.mxu0 0
    %881 = vmatprep.subr.bf16.mxu0 0
    %882 = vmatpush2.bf16.msra.mxu0 0
    %883 = vmatprep.subr.bf16.mxu0 0
    %884 = vmatpush2.bf16.msra.mxu0 0
    %885 = vmatprep.subr.bf16.mxu0 0
    %886 = vmatpush2.bf16.msra.mxu0 0
    %887 = vmatprep.subr.bf16.mxu0 0
    %888 = vmatpush2.bf16.msra.mxu0 0
    %889 = vmatprep.subr.bf16.mxu0 0
    %890 = vmatpush2.bf16.msra.mxu0 0
    %891 = vmatprep.subr.bf16.mxu0 0
    %892 = vmatpush2.bf16.msra.mxu0 0
    %893 = vmatprep.mubr.bf16.mxu0 0
    %894 = vmatmul.mubr.bf16.gmra.mxu0 %v856
    %v895 = vpop.f32.mrf.mxu0
    %v896 = vadd.f32 %v841, %v895
    %v897 = vpop.f32.mrf.mxu0
    %v898 = vpop.f32.mrf.mxu0
    %v899 = vadd.f32 %v841, %v898
    %v900 = vpop.f32.mrf.mxu0
    %901 = vmatprep.mubr.bf16.mxu0 0
    %902 = vmatmul.mubr.bf16.gmra.mxu0 %v859
    %v903 = vpop.f32.mrf.mxu0
    %v904 = vadd.f32 %v841, %v903
    %v905 = vpop.f32.mrf.mxu0
    %v906 = vpop.f32.mrf.mxu0
    %v907 = vadd.f32 %v841, %v906
    %v908 = vpop.f32.mrf.mxu0
    %909 = vdwg.mxu0
    %v910 = vadd.f32 %v896, %v99
    %v911 = vadd.f32 %v899, %v100
    %v912 = vadd.f32 %v904, %v101
    %v913 = vadd.f32 %v907, %v102
    %v914 = vmul.f32 %v910, %v910
    %v915 = vmul.f32 %v911, %v911
    %v916 = vmul.f32 %v912, %v912
    %v917 = vmul.f32 %v913, %v913
    %v918 = vsel %vm65, %v914, 0.0
    %919 = vadd.xlane.f32.xlu0 %v918
    %v920 = vpop.xlane.xlu0 %919
    %v921 = vsel %vm65, %v915, 0.0
    %922 = vadd.xlane.f32.xlu0 %v921
    %v923 = vpop.xlane.xlu0 %922
    %v924 = vsel %vm65, %v916, 0.0
    %925 = vadd.xlane.f32.xlu0 %v924
    %v926 = vpop.xlane.xlu0 %925
    %v927 = vsel %vm65, %v917, 0.0
    %928 = vadd.xlane.f32.xlu0 %v927
    %v929 = vpop.xlane.xlu0 %928
    %v930 = vmul.f32 %v920, %v78
    %v931 = vmul.f32 %v923, %v78
    %v932 = vmul.f32 %v926, %v78
    %v933 = vmul.f32 %v929, %v78
    %v934 = vadd.f32 %v930, 1e-05
    %v935 = vadd.f32 %v931, 1e-05
    %v936 = vadd.f32 %v932, 1e-05
    %v937 = vadd.f32 %v933, 1e-05
    %v938 = vrsqrt.pop %v934
    %v939 = vrsqrt.pop %v935
    %v940 = vrsqrt.pop %v936
    %v941 = vrsqrt.pop %v937
    %v942 = vmul.f32 %v910, %v938
    %v943 = vmul.f32 %v911, %v939
    %v944 = vmul.f32 %v912, %v940
    %v945 = vmul.f32 %v913, %v941
    %v946 = vlaneseq
    %v947 = vshrl.u32 %v946, 7
    %v948 = vsub.s32 1, %v947
    %v949 = vrot.slane %v60, %v948
    %v950 = vmul.f32 %v942, %v949
    %v951 = vmul.f32 %v943, %v949
    %v952 = vmul.f32 %v944, %v949
    %v953 = vmul.f32 %v945, %v949
    %v954 = vpack.c.bf16 %v911, %v910
    %v955 = vpack.c.bf16 %v913, %v912
    %v956 = vld [vmem:[%s10] sm:$0xff]
    %v957 = vld [vmem:[%s10 + $0x8] sm:$0xff]
    %v958 = vld [vmem:[%s10 + $0x10] sm:$0xff]
    %v959 = vld [vmem:[%s10 + $0x18] sm:$0xff]
    %v964 = vunpack.c.l.b16 %v956
    %v965 = vunpack.c.h.b16 %v956
    %v966 = vunpack.c.l.b16 %v957
    %v967 = vunpack.c.h.b16 %v957
    %v968 = vunpack.c.l.b16 %v958
    %v969 = vunpack.c.h.b16 %v958
    %v970 = vunpack.c.l.b16 %v959
    %v971 = vunpack.c.h.b16 %v959
    %v972 = vpack.c.b16 %v966, %v964
    %v973 = vpack.c.b16 %v967, %v965
    %v974 = vpack.c.b16 %v970, %v968
    %v975 = vpack.c.b16 %v971, %v969
    %v981 = vsel %vm65, %v954, 0
    %v984 = vsel %vm65, %v955, 0
    %986 = vmatprep.subr.bf16.mxu0 0
    %987 = vmatpush1.bf16.msra.mxu0 0
    %988 = vmatprep.subr.bf16.mxu0 0
    %989 = vmatpush1.bf16.msra.mxu0 0
    %990 = vmatprep.subr.bf16.mxu0 0
    %991 = vmatpush1.bf16.msra.mxu0 0
    %992 = vmatprep.subr.bf16.mxu0 0
    %993 = vmatpush1.bf16.msra.mxu0 0
    %994 = vmatprep.subr.bf16.mxu0 0
    %995 = vmatpush1.bf16.msra.mxu0 0
    %996 = vmatprep.subr.bf16.mxu0 0
    %997 = vmatpush1.bf16.msra.mxu0 0
    %998 = vmatprep.subr.bf16.mxu0 %v975
    %999 = vmatpush1.bf16.msra.mxu0 %v974
    %1000 = vmatprep.subr.bf16.mxu0 %v973
    %1001 = vmatpush1.bf16.msra.mxu0 %v972
    %1002 = vmatprep.subr.bf16.mxu0 0
    %1003 = vmatpush2.bf16.msra.mxu0 0
    %1004 = vmatprep.subr.bf16.mxu0 0
    %1005 = vmatpush2.bf16.msra.mxu0 0
    %1006 = vmatprep.subr.bf16.mxu0 0
    %1007 = vmatpush2.bf16.msra.mxu0 0
    %1008 = vmatprep.subr.bf16.mxu0 0
    %1009 = vmatpush2.bf16.msra.mxu0 0
    %1010 = vmatprep.subr.bf16.mxu0 0
    %1011 = vmatpush2.bf16.msra.mxu0 0
    %1012 = vmatprep.subr.bf16.mxu0 0
    %1013 = vmatpush2.bf16.msra.mxu0 0
    %1014 = vmatprep.subr.bf16.mxu0 0
    %1015 = vmatpush2.bf16.msra.mxu0 0
    %1016 = vmatprep.subr.bf16.mxu0 0
    %1017 = vmatpush2.bf16.msra.mxu0 0
    %1018 = vmatprep.mubr.bf16.mxu0 0
    %1019 = vmatmul.mubr.bf16.gmra.mxu0 %v981
    %v1020 = vpop.f32.mrf.mxu0
    %v1021 = vadd.f32 0.0, %v1020
    %v1022 = vpop.f32.mrf.mxu0
    %v1023 = vadd.f32 0.0, %v1022
    %v1024 = vpop.f32.mrf.mxu0
    %v1025 = vadd.f32 0.0, %v1024
    %v1026 = vpop.f32.mrf.mxu0
    %v1027 = vadd.f32 0.0, %v1026
    %1028 = vmatprep.mubr.bf16.mxu0 0
    %1029 = vmatmul.mubr.bf16.gmra.mxu0 %v984
    %v1030 = vpop.f32.mrf.mxu0
    %v1031 = vadd.f32 0.0, %v1030
    %v1032 = vpop.f32.mrf.mxu0
    %v1033 = vadd.f32 0.0, %v1032
    %v1034 = vpop.f32.mrf.mxu0
    %v1035 = vadd.f32 0.0, %v1034
    %v1036 = vpop.f32.mrf.mxu0
    %v1037 = vadd.f32 0.0, %v1036
    %1038 = vdwg.mxu0
    %v1039 = vmul.f32 %v1021, 0.5
    %v1040 = vmul.f32 %v1025, 0.5
    %v1041 = vmul.f32 %v1031, 0.5
    %v1042 = vmul.f32 %v1035, 0.5
    %v1043 = vmul.f32 %v1021, 0.044715
    %v1044 = vmul.f32 %v1025, 0.044715
    %v1045 = vmul.f32 %v1031, 0.044715
    %v1046 = vmul.f32 %v1035, 0.044715
    %v1047 = vmul.f32 %v1043, %v1021
    %v1048 = vmul.f32 %v1044, %v1025
    %v1049 = vmul.f32 %v1045, %v1031
    %v1050 = vmul.f32 %v1046, %v1035
    %v1051 = vmul.f32 %v1047, %v1021
    %v1052 = vmul.f32 %v1048, %v1025
    %v1053 = vmul.f32 %v1049, %v1031
    %v1054 = vmul.f32 %v1050, %v1035
    %v1055 = vadd.f32 %v1021, %v1051
    %v1056 = vadd.f32 %v1025, %v1052
    %v1057 = vadd.f32 %v1031, %v1053
    %v1058 = vadd.f32 %v1035, %v1054
    %v1059 = vmul.f32 %v1055, 0.7978846
    %v1060 = vmul.f32 %v1056, 0.7978846
    %v1061 = vmul.f32 %v1057, 0.7978846
    %v1062 = vmul.f32 %v1058, 0.7978846
    %v1063 = vtanh.pop %v1059
    %v1064 = vtanh.pop %v1060
    %v1065 = vtanh.pop %v1061
    %v1066 = vtanh.pop %v1062
    %v1067 = vadd.f32 %v1063, 1.0
    %v1068 = vadd.f32 %v1064, 1.0
    %v1069 = vadd.f32 %v1065, 1.0
    %v1070 = vadd.f32 %v1066, 1.0
    %v1071 = vmul.f32 %v1039, %v1067
    %v1072 = vmul.f32 %v1040, %v1068
    %v1073 = vmul.f32 %v1041, %v1069
    %v1074 = vmul.f32 %v1042, %v1070
    %v1075 = vmul.f32 %v1071, %v1023
    %v1076 = vmul.f32 %v1072, %v1027
    %v1077 = vmul.f32 %v1073, %v1033
    %v1078 = vmul.f32 %v1074, %v1037
    %v1079 = vpack.c.bf16 %v1076, %v1075
    %v1080 = vpack.c.bf16 %v1078, %v1077
    %v1081 = vld [vmem:[%s11] sm:$0xf]
    %v1082 = vld [vmem:[%s11 + $0x4] sm:$0xf]
    %v1083 = vld [vmem:[%s11 + $0x8] sm:$0xf]
    %v1084 = vld [vmem:[%s11 + $0xc] sm:$0xf]
    %v1085 = vld [vmem:[%s11 + $0x10] sm:$0xf]
    %v1086 = vld [vmem:[%s11 + $0x14] sm:$0xf]
    %v1087 = vld [vmem:[%s11 + $0x18] sm:$0xf]
    %v1088 = vld [vmem:[%s11 + $0x1c] sm:$0xf]
    %v1089 = vld [vmem:[%s11 + $0x20] sm:$0xf]
    %v1090 = vld [vmem:[%s11 + $0x24] sm:$0xf]
    %v1091 = vld [vmem:[%s11 + $0x28] sm:$0xf]
    %v1092 = vld [vmem:[%s11 + $0x2c] sm:$0xf]
    %v1093 = vld [vmem:[%s11 + $0x30] sm:$0xf]
    %v1094 = vld [vmem:[%s11 + $0x34] sm:$0xf]
    %v1095 = vld [vmem:[%s11 + $0x38] sm:$0xf]
    %v1096 = vld [vmem:[%s11 + $0x3c] sm:$0xf]
    %v1113 = vunpack.c.l.b16 %v1081
    %v1114 = vunpack.c.l.b16 %v1082
    %v1115 = vunpack.c.l.b16 %v1083
    %v1116 = vunpack.c.l.b16 %v1084
    %v1117 = vunpack.c.l.b16 %v1085
    %v1118 = vunpack.c.l.b16 %v1086
    %v1119 = vunpack.c.l.b16 %v1087
    %v1120 = vunpack.c.l.b16 %v1088
    %v1121 = vunpack.c.l.b16 %v1089
    %v1122 = vunpack.c.l.b16 %v1090
    %v1123 = vunpack.c.l.b16 %v1091
    %v1124 = vunpack.c.l.b16 %v1092
    %v1125 = vunpack.c.l.b16 %v1093
    %v1126 = vunpack.c.l.b16 %v1094
    %v1127 = vunpack.c.l.b16 %v1095
    %v1128 = vunpack.c.l.b16 %v1096
    %v1129 = vpack.c.b16 %v1114, %v1113
    %v1130 = vpack.c.b16 %v1116, %v1115
    %v1131 = vpack.c.b16 %v1118, %v1117
    %v1132 = vpack.c.b16 %v1120, %v1119
    %v1133 = vpack.c.b16 %v1122, %v1121
    %v1134 = vpack.c.b16 %v1124, %v1123
    %v1135 = vpack.c.b16 %v1126, %v1125
    %v1136 = vpack.c.b16 %v1128, %v1127
    %1145 = vmatprep.subr.bf16.mxu0 0
    %1146 = vmatpush1.bf16.msra.mxu0 %v1136
    %1147 = vmatprep.subr.bf16.mxu0 0
    %1148 = vmatpush1.bf16.msra.mxu0 %v1135
    %1149 = vmatprep.subr.bf16.mxu0 0
    %1150 = vmatpush1.bf16.msra.mxu0 %v1134
    %1151 = vmatprep.subr.bf16.mxu0 0
    %1152 = vmatpush1.bf16.msra.mxu0 %v1133
    %1153 = vmatprep.subr.bf16.mxu0 0
    %1154 = vmatpush1.bf16.msra.mxu0 %v1132
    %1155 = vmatprep.subr.bf16.mxu0 0
    %1156 = vmatpush1.bf16.msra.mxu0 %v1131
    %1157 = vmatprep.subr.bf16.mxu0 0
    %1158 = vmatpush1.bf16.msra.mxu0 %v1130
    %1159 = vmatprep.subr.bf16.mxu0 0
    %1160 = vmatpush1.bf16.msra.mxu0 %v1129
    %1161 = vmatprep.subr.bf16.mxu0 0
    %1162 = vmatpush2.bf16.msra.mxu0 0
    %1163 = vmatprep.subr.bf16.mxu0 0
    %1164 = vmatpush2.bf16.msra.mxu0 0
    %1165 = vmatprep.subr.bf16.mxu0 0
    %1166 = vmatpush2.bf16.msra.mxu0 0
    %1167 = vmatprep.subr.bf16.mxu0 0
    %1168 = vmatpush2.bf16.msra.mxu0 0
    %1169 = vmatprep.subr.bf16.mxu0 0
    %1170 = vmatpush2.bf16.msra.mxu0 0
    %1171 = vmatprep.subr.bf16.mxu0 0
    %1172 = vmatpush2.bf16.msra.mxu0 0
    %1173 = vmatprep.subr.bf16.mxu0 0
    %1174 = vmatpush2.bf16.msra.mxu0 0
    %1175 = vmatprep.subr.bf16.mxu0 0
    %1176 = vmatpush2.bf16.msra.mxu0 0
    %1177 = vmatprep.mubr.bf16.mxu0 0
    %1178 = vmatmul.mubr.bf16.gmra.mxu0 %v1079
    %v1179 = vpop.f32.mrf.mxu0
    %v1180 = vadd.f32 %v950, %v1179
    %v1181 = vpop.f32.mrf.mxu0
    %v1182 = vpop.f32.mrf.mxu0
    %v1183 = vadd.f32 %v951, %v1182
    %v1184 = vpop.f32.mrf.mxu0
    %1185 = vmatprep.mubr.bf16.mxu0 0
    %1186 = vmatmul.mubr.bf16.gmra.mxu0 %v1080
    %v1187 = vpop.f32.mrf.mxu0
    %v1188 = vadd.f32 %v952, %v1187
    %v1189 = vpop.f32.mrf.mxu0
    %v1190 = vpop.f32.mrf.mxu0
    %v1191 = vadd.f32 %v953, %v1190
    %v1192 = vpop.f32.mrf.mxu0
    %1193 = vdwg.mxu0
    %1194 = vst.msk [vmem:[#allocation2] sm:$0xff] %vm65, %v1180
    %1195 = vst.msk [vmem:[#allocation2 + $0x8] sm:$0xff] %vm65, %v1183
    %1196 = vst.msk [vmem:[#allocation2 + $0x10] sm:$0xff] %vm65, %v1188
    %1197 = vst.msk [vmem:[#allocation2 + $0x18] sm:$0xff] %vm65, %v1191
    // Predicated region
    $region54: #{tpu_custom_call.1} parent=1 // pred_check
      %p1198 = pneg %p43
    $region55: #{tpu_custom_call.1} parent=1 // pred_check_branch
      %1200 = sbr.rel (%p1198) target = $region57
    $region56: #{tpu_custom_call.1} parent=1 // pred_region
      %1201 = vst.msk [vmem:[#allocation3] sm:$0xff] %vm65, %v1180
      %1202 = vst.msk [vmem:[#allocation3 + $0x8] sm:$0xff] %vm65, %v1183
      %1203 = vst.msk [vmem:[#allocation3 + $0x10] sm:$0xff] %vm65, %v1188
      %1204 = vst.msk [vmem:[#allocation3 + $0x18] sm:$0xff] %vm65, %v1191
    $region57: #{tpu_custom_call.1} parent=1 // pred_fallthru
      _
    // Predicated region
    $region58: #{tpu_custom_call.1} parent=1 // pred_check
      _
    $region59: #{tpu_custom_call.1} parent=1 // pred_check_branch
      %1206 = sbr.rel (0) target = $region61
    $region60: #{tpu_custom_call.1} parent=1 // pred_region
      %s1208 = ssub.s32 512, 512
      %1209 = vsyncadd [#allocation4], %s1208
      %s1210 = sshll.u32 [#allocation3], 4
      %s1211 = int_to_ptr.vmem [resolvable:$true] %s1210
      %1216 = dma.vmem_to_hbm [thread:$0]  %s1211, 512, %s12, [#allocation4], 128, 128, 8
    $region61: #{tpu_custom_call.1} parent=1 // pred_fallthru
      _
    // Predicated region
    $region62: #{tpu_custom_call.1} parent=1 // pred_check
      _
    $region63: #{tpu_custom_call.1} parent=1 // pred_check_branch
      %1218 = sbr.rel (0) target = $region65
    $region64: #{tpu_custom_call.1} parent=1 // pred_region
      %1219 = dma.done [#allocation4], 512
    $region65: #{tpu_custom_call.1} parent=1 // pred_fallthru
      _
    %1220 = vsyncpa [#allocation4], 1

</llo_original>
